<compile_context>
chip_gen: v7x
topology: tpu7x:2x2x1
jax: 0.10.0
libtpu: 0.0.40
codegen_flags: <defaults>
</compile_context>

<pallas_src>
import functools

import jax
import jax.numpy as jnp
import numpy as np
from jax import lax
from jax.experimental import pallas as pl
from jax.experimental.pallas import tpu as pltpu

C1 = 16    # conv1 output channels
C2 = 32    # conv2 output channels
DH = 256   # fc1 hidden size


# ----------------------------------------------------------------------------
# Fused Pallas kernel
# ----------------------------------------------------------------------------
def _cnn_fused_kernel(x2d_ref, m1a_ref, m1b_ref, b1_ref,
                      m2a_ref, m2b_ref, b2_ref,
                      wfc1_ref, bfc1_ref, wfc2_ref, bfc2_ref, rmask_ref,
                      out_ref, xpad_ref, h1pad_ref, h2_ref,
                      *, batch, cin, h, w):
    """conv1+relu -> conv2+relu -> maxpool2x2 -> fc1+relu -> fc2, all in VMEM.

    Row layout: one P = h+4 row block per batch element (the row index is
    preserved through every matmul); channels ride the lane dimension.
    """
    f32, bf16 = jnp.float32, jnp.bfloat16
    P = h + 4                     # per-batch row pitch (needs >= h + 4)
    R = batch * P
    wo1, wo2 = w + 1, w + 2       # conv1 / conv2 output widths
    L = wo2 * C2                  # conv2 output row width (lanes)
    ph_n = (h + 2) // 2           # pooled rows

    # ---- NCHW -> (row = h, col = ci*w + wi) layout + H zero-pad, in-kernel --
    # x2d is x.reshape(batch*cin*h, w) (a free view outside); each (n, ci)
    # plane lands in its own contiguous column block -> plain 2-D block copies.
    xpad_ref[...] = jnp.zeros_like(xpad_ref)        # (R, cin*w): ~2 vregs
    for n in range(batch):
        for ci in range(cin):
            src = (n * cin + ci) * h
            xpad_ref[n * P + 2:n * P + 2 + h, ci * w:(ci + 1) * w] = \
                x2d_ref[src:src + h, :]

    # ---- conv1: two batched row-shifted matmuls (W-pad folded into m1a/m1b) -
    v = jnp.dot(xpad_ref[0:R - 1, :].astype(bf16), m1a_ref[...],
                preferred_element_type=f32)
    v = v + jnp.dot(xpad_ref[1:R, :].astype(bf16), m1b_ref[...],
                    preferred_element_type=f32)
    # bias + relu; the row mask rebuilds conv2's H zero-padding exactly in
    # registers (pad / spare rows -> 0.0), so h1pad never needs a bulk zero.
    h1 = jnp.maximum(v + b1_ref[...], 0.0) * rmask_ref[...]   # (R-1, wo1*C1)
    h1pad_ref[0:R - 1, :] = h1                                # col 0, 112 wide

    # ---- conv2: same batched two-dot structure, K = wo1*C1 = one lane tile --
    a2 = jnp.dot(h1pad_ref[0:R - 2, :].astype(bf16), m2a_ref[...],
                 preferred_element_type=f32)
    a2 = a2 + jnp.dot(h1pad_ref[1:R - 1, :].astype(bf16), m2b_ref[...],
                      preferred_element_type=f32)
    h2 = jnp.maximum(a2 + b2_ref[...], 0.0)                   # (R-2, wo2*C2)

    # ---- maxpool 2x2, vectorized --------------------------------------------
    # W-direction pair max on the whole slab: result col j = max(col j, j+C2).
    # Only even-wo column blocks are consumed by fc1 (odd-wo blocks hit zero
    # rows of the re-packed fc1 weight), so no lane compaction is needed.
    wmax = jnp.maximum(h2[:, :L - C2], h2[:, C2:])            # (R-2, L-C2)
    h2_ref[0:R - 2, 0:L - C2] = wmax
    # The last C2 columns are read (full-row loads below) but never written;
    # keep them finite so NaN * 0-weight cannot poison fc1.
    h2_ref[:, L - C2:] = jnp.zeros((R, C2), f32)

    # H-direction pair max + (ph) flatten: a few full-row loads and lane-tile
    # aligned (256-wide) concats; zero narrow stores.
    rows = []
    for n in range(batch):
        segs = []
        for ph in range(ph_n):
            r0 = n * P + 2 * ph
            segs.append(jnp.maximum(h2_ref[r0:r0 + 1, :],
                                    h2_ref[r0 + 1:r0 + 2, :]))
        rows.append(jnp.concatenate(segs, axis=1))            # (1, ph_n*L)
    flat = jnp.concatenate(rows, axis=0)                      # (batch, ph_n*L)

    # ---- fc1 + relu, fc2 (weights pre-permuted / zero-padded, bf16) ---------
    hfc = jnp.maximum(
        jnp.dot(flat.astype(bf16), wfc1_ref[...], preferred_element_type=f32)
        + bfc1_ref[...], 0.0)
    out = jnp.dot(hfc.astype(bf16), wfc2_ref[...],
                  preferred_element_type=f32) + bfc2_ref[...]
    out_ref[...] = out.astype(out_ref.dtype)


def _full_spec(shape):
    nd = len(shape)
    return pl.BlockSpec(shape, lambda i, _nd=nd: (0,) * _nd)


# ----------------------------------------------------------------------------
# Parameter preparation (one-time, outside the jitted forward)
# ----------------------------------------------------------------------------
def _conv2x2_shift_mats(w_oihw, w_in, *, in_channel_major):
    """Fold W-shift, W zero-padding, the 2x2 taps and channel mixing into two
    dense (w_in*cin, (w_in+1)*cout) matrices, one per kernel row dh.

    Input-row index:  ci*w_in + wi  (channel-major: conv1's raw-x layout) or
                      wi*cin  + ci  (channel-minor: conv1's output layout).
    Output-col index: wo*cout + co  (channel-minor, always).
    Taps with wi = wo + dw - 1 outside [0, w_in) are simply absent, so the
    W zero-padding never materializes anywhere.
    """
    w_np = np.asarray(w_oihw, np.float32)
    cout, cin, kh, kw = w_np.shape
    w_out = w_in + 1
    mats = []
    for dh in range(kh):
        m = np.zeros((w_in * cin, w_out * cout), np.float32)
        for dw in range(kw):
            for wo in range(w_out):
                wi = wo + dw - 1
                if not 0 <= wi < w_in:
                    continue
                for ci in range(cin):
                    row = ci * w_in + wi if in_channel_major else wi * cin + ci
                    m[row, wo * cout:(wo + 1) * cout] = w_np[:, ci, dh, dw]
        mats.append(m)
    return mats


def prepare_params(params, input_shape):
    """Repack PyTorch-layout params into the kernel layout (runs once)."""
    n, cin, h, w = input_shape
    P, R = h + 4, n * (h + 4)
    wo1, wo2 = w + 1, w + 2
    ph_n, pw_n = (h + 2) // 2, (w + 2) // 2
    kf = C2 * ph_n * pw_n
    assert params["wfc1"].shape == (DH, kf), (params["wfc1"].shape, kf)

    m1a, m1b = _conv2x2_shift_mats(params["w1"], w, in_channel_major=True)
    m2a, m2b = _conv2x2_shift_mats(params["w2"], wo1, in_channel_major=False)

    # fc1: fold PyTorch's NCHW .view order, the kernel's (ph | wo | c) sparse
    # layout and the odd-wo column discard into one zero-padded weight repack.
    L = wo2 * C2
    wsrc = np.asarray(params["wfc1"], np.float32)            # (DH, kf)
    wfc1p = np.zeros((ph_n * L, DH), np.float32)
    for ph in range(ph_n):
        for pw in range(pw_n):
            for co in range(C2):
                src = co * (ph_n * pw_n) + ph * pw_n + pw
                wfc1p[ph * L + (2 * pw) * C2 + co, :] = wsrc[:, src]

    # Row mask: 1 on valid conv1-output rows of each P-row block, 0 on the
    # (conv2) padding / spare rows.
    rowmask = np.zeros((R - 1, 1), np.float32)
    for r in range(R - 1):
        if 1 <= (r % P) <= h + 1:
            rowmask[r, 0] = 1.0

    bf16 = jnp.bfloat16
    return {
        "m1a": jnp.asarray(m1a, bf16), "m1b": jnp.asarray(m1b, bf16),
        "b1t": jnp.tile(jnp.asarray(params["b1"], jnp.float32),
                        wo1).reshape(1, wo1 * C1),
        "m2a": jnp.asarray(m2a, bf16), "m2b": jnp.asarray(m2b, bf16),
        "b2t": jnp.tile(jnp.asarray(params["b2"], jnp.float32),
                        wo2).reshape(1, wo2 * C2),
        "wfc1": jnp.asarray(wfc1p, bf16),
        "bfc1": jnp.asarray(params["bfc1"], jnp.float32).reshape(1, DH),
        "wfc2": jnp.asarray(np.asarray(params["wfc2"], np.float32).T, bf16),
        "bfc2": jnp.asarray(params["bfc2"], jnp.float32).reshape(1, -1),
        "rowmask": jnp.asarray(rowmask),
    }


# ----------------------------------------------------------------------------
# Forward pass
# ----------------------------------------------------------------------------
@jax.jit
def cnn_forward(x, prep):
    """x: (N, Cin, H, W) NCHW float32; prep: output of prepare_params()."""
    n, cin, h, w = x.shape
    dout = prep["bfc2"].shape[-1]
    P, R = h + 4, n * (h + 4)
    wo1, wo2 = w + 1, w + 2

    # Pure view (no transpose / pad outside the kernel, rev #6).
    x2d = x.reshape(n * cin * h, w)

    args = (x2d, prep["m1a"], prep["m1b"], prep["b1t"],
            prep["m2a"], prep["m2b"], prep["b2t"],
            prep["wfc1"], prep["bfc1"], prep["wfc2"], prep["bfc2"],
            prep["rowmask"])

    kern = functools.partial(_cnn_fused_kernel, batch=n, cin=cin, h=h, w=w)
    return pl.pallas_call(
        kern,
        out_shape=jax.ShapeDtypeStruct((n, dout), jnp.float32),
        grid=(1,),
        in_specs=[_full_spec(a.shape) for a in args],
        out_specs=_full_spec((n, dout)),
        scratch_shapes=[
            pltpu.VMEM((R, cin * w), jnp.float32),    # padded conv1 input
            pltpu.VMEM((R, wo1 * C1), jnp.float32),   # H-padded conv1 output
            pltpu.VMEM((R, wo2 * C2), jnp.float32),   # W-maxed conv2 output
        ],
        compiler_params=pltpu.CompilerParams(
            dimension_semantics=("arbitrary",)),
    )(*args)


# ----------------------------------------------------------------------------
# Init + pure-JAX reference (PyTorch-layout params)
# ----------------------------------------------------------------------------
def init_params(key, input_channels, output_dim):
    ks = jax.random.split(key, 8)

    def u(k, shape, fan_in):
        bound = 1.0 / np.sqrt(fan_in)
        return jax.random.uniform(k, shape, jnp.float32, -bound, bound)

    return {
        "w1": u(ks[0], (C1, input_channels, 2, 2), input_channels * 4),
        "b1": u(ks[1], (C1,), input_channels * 4),
        "w2": u(ks[2], (C2, C1, 2, 2), C1 * 4),
        "b2": u(ks[3], (C2,), C1 * 4),
        "wfc1": u(ks[4], (DH, 384), 384),
        "bfc1": u(ks[5], (DH,), 384),
        "wfc2": u(ks[6], (output_dim, DH), DH),
        "bfc2": u(ks[7], (output_dim,), DH),
    }


def cnn_forward_reference(x, params):
    """Pure-JAX reference with the same semantics as the PyTorch module."""
    def conv(x, w, b):
        y = lax.conv_general_dilated(
            x, w, window_strides=(1, 1), padding=((1, 1), (1, 1)),
            dimension_numbers=("NCHW", "OIHW", "NCHW"))
        return jax.nn.relu(y + b[None, :, None, None])

    h = conv(x, params["w1"], params["b1"])
    h = conv(h, params["w2"], params["b2"])
    h = lax.reduce_window(h, -jnp.inf, lax.max, (1, 1, 2, 2), (1, 1, 2, 2),
                          "VALID")
    flat = h.reshape(x.shape[0], -1)
    h = jax.nn.relu(flat @ params["wfc1"].T + params["bfc1"])
    return h @ params["wfc2"].T + params["bfc2"]


if __name__ == "__main__":
    input_channels = 4
    output_dim = 8
    N, H, W = 2, 4, 6   # pooled (3, 4); 32*3*4 = 384, as fc1 requires

    key = jax.random.PRNGKey(0)
    kx, kp = jax.random.split(key)
    x = jax.random.normal(kx, (N, input_channels, H, W), jnp.float32)
    params = init_params(kp, input_channels, output_dim)
    prep = prepare_params(params, x.shape)

    out = jax.block_until_ready(cnn_forward(x, prep))

    ref = cnn_forward_reference(x, params)
    # Tolerance sized for the bf16 weight path (activations/accum stay f32).
    np.testing.assert_allclose(np.asarray(out), np.asarray(ref),
                               rtol=2e-2, atol=2e-2)
    assert out.shape == (N, output_dim)
    print("KERNEL_OK")
</pallas_src>

<mosaic_0001>
module attributes {stable_mosaic.version = 11 : i64} {
  func.func @_cnn_fused_kernel(%arg0: i32, %arg1: memref<32x6xf32, #tpu.memory_space<vmem>>, %arg2: memref<24x112xbf16, #tpu.memory_space<vmem>>, %arg3: memref<24x112xbf16, #tpu.memory_space<vmem>>, %arg4: memref<1x112xf32, #tpu.memory_space<vmem>>, %arg5: memref<112x256xbf16, #tpu.memory_space<vmem>>, %arg6: memref<112x256xbf16, #tpu.memory_space<vmem>>, %arg7: memref<1x256xf32, #tpu.memory_space<vmem>>, %arg8: memref<768x256xbf16, #tpu.memory_space<vmem>>, %arg9: memref<1x256xf32, #tpu.memory_space<vmem>>, %arg10: memref<256x8xbf16, #tpu.memory_space<vmem>>, %arg11: memref<1x8xf32, #tpu.memory_space<vmem>>, %arg12: memref<15x1xf32, #tpu.memory_space<vmem>>, %arg13: memref<2x8xf32, #tpu.memory_space<vmem>>, %arg14: memref<16x24xf32, #tpu.memory_space<vmem>>, %arg15: memref<16x112xf32, #tpu.memory_space<vmem>>, %arg16: memref<16x256xf32, #tpu.memory_space<vmem>>) attributes {dimension_semantics = [#tpu.dimension_semantics<arbitrary>], iteration_bounds = array<i64: 1>, scalar_prefetch = 0 : i64, scratch_operands = 3 : i64, tpu.core_type = #tpu.core_type<tc>, window_params = [{pipeline_mode = #tpu.pipeline_mode<synchronous>, transform_indices = @transform_0, window_bounds = array<i64: 32, 6>}, {pipeline_mode = #tpu.pipeline_mode<synchronous>, transform_indices = @transform_1, window_bounds = array<i64: 24, 112>}, {pipeline_mode = #tpu.pipeline_mode<synchronous>, transform_indices = @transform_2, window_bounds = array<i64: 24, 112>}, {pipeline_mode = #tpu.pipeline_mode<synchronous>, transform_indices = @transform_3, window_bounds = array<i64: 1, 112>}, {pipeline_mode = #tpu.pipeline_mode<synchronous>, transform_indices = @transform_4, window_bounds = array<i64: 112, 256>}, {pipeline_mode = #tpu.pipeline_mode<synchronous>, transform_indices = @transform_5, window_bounds = array<i64: 112, 256>}, {pipeline_mode = #tpu.pipeline_mode<synchronous>, transform_indices = @transform_6, window_bounds = array<i64: 1, 256>}, {pipeline_mode = #tpu.pipeline_mode<synchronous>, transform_indices = @transform_7, window_bounds = array<i64: 768, 256>}, {pipeline_mode = #tpu.pipeline_mode<synchronous>, transform_indices = @transform_8, window_bounds = array<i64: 1, 256>}, {pipeline_mode = #tpu.pipeline_mode<synchronous>, transform_indices = @transform_9, window_bounds = array<i64: 256, 8>}, {pipeline_mode = #tpu.pipeline_mode<synchronous>, transform_indices = @transform_10, window_bounds = array<i64: 1, 8>}, {pipeline_mode = #tpu.pipeline_mode<synchronous>, transform_indices = @transform_11, window_bounds = array<i64: 15, 1>}, {pipeline_mode = #tpu.pipeline_mode<synchronous>, transform_indices = @transform_12, window_bounds = array<i64: 2, 8>}]} {
    %cst = arith.constant 0.000000e+00 : f32
    %0 = vector.broadcast %cst : f32 to vector<16x24xf32>
    %c0 = arith.constant 0 : index
    %c0_0 = arith.constant 0 : index
    %1 = vector.load %arg14[%c0, %c0_0] : memref<16x24xf32, #tpu.memory_space<vmem>>, vector<16x24xf32>
    tpu.vector_store %arg14[%c0, %c0_0], %0 {strides = array<i32>} : memref<16x24xf32, #tpu.memory_space<vmem>>, vector<16x24xf32>,
    %c0_1 = arith.constant 0 : index
    %c0_2 = arith.constant 0 : index
    %2 = vector.load %arg1[%c0_1, %c0_2] : memref<32x6xf32, #tpu.memory_space<vmem>>, vector<4x6xf32>
    %c2 = arith.constant 2 : index
    %c0_3 = arith.constant 0 : index
    %3 = vector.load %arg14[%c2, %c0_3] : memref<16x24xf32, #tpu.memory_space<vmem>>, vector<4x6xf32>
    tpu.vector_store %arg14[%c2, %c0_3], %2 {strides = array<i32>} : memref<16x24xf32, #tpu.memory_space<vmem>>, vector<4x6xf32>,
    %c4 = arith.constant 4 : index
    %c0_4 = arith.constant 0 : index
    %4 = vector.load %arg1[%c4, %c0_4] : memref<32x6xf32, #tpu.memory_space<vmem>>, vector<4x6xf32>
    %c2_5 = arith.constant 2 : index
    %c6 = arith.constant 6 : index
    %5 = vector.load %arg14[%c2_5, %c6] : memref<16x24xf32, #tpu.memory_space<vmem>>, vector<4x6xf32>
    tpu.vector_store %arg14[%c2_5, %c6], %4 {strides = array<i32>} : memref<16x24xf32, #tpu.memory_space<vmem>>, vector<4x6xf32>,
    %c8 = arith.constant 8 : index
    %c0_6 = arith.constant 0 : index
    %6 = vector.load %arg1[%c8, %c0_6] : memref<32x6xf32, #tpu.memory_space<vmem>>, vector<4x6xf32>
    %c2_7 = arith.constant 2 : index
    %c12 = arith.constant 12 : index
    %7 = vector.load %arg14[%c2_7, %c12] : memref<16x24xf32, #tpu.memory_space<vmem>>, vector<4x6xf32>
    tpu.vector_store %arg14[%c2_7, %c12], %6 {strides = array<i32>} : memref<16x24xf32, #tpu.memory_space<vmem>>, vector<4x6xf32>,
    %c12_8 = arith.constant 12 : index
    %c0_9 = arith.constant 0 : index
    %8 = vector.load %arg1[%c12_8, %c0_9] : memref<32x6xf32, #tpu.memory_space<vmem>>, vector<4x6xf32>
    %c2_10 = arith.constant 2 : index
    %c18 = arith.constant 18 : index
    %9 = vector.load %arg14[%c2_10, %c18] : memref<16x24xf32, #tpu.memory_space<vmem>>, vector<4x6xf32>
    tpu.vector_store %arg14[%c2_10, %c18], %8 {strides = array<i32>} : memref<16x24xf32, #tpu.memory_space<vmem>>, vector<4x6xf32>,
    %c16 = arith.constant 16 : index
    %c0_11 = arith.constant 0 : index
    %10 = vector.load %arg1[%c16, %c0_11] : memref<32x6xf32, #tpu.memory_space<vmem>>, vector<4x6xf32>
    %c10 = arith.constant 10 : index
    %c0_12 = arith.constant 0 : index
    %11 = vector.load %arg14[%c10, %c0_12] : memref<16x24xf32, #tpu.memory_space<vmem>>, vector<4x6xf32>
    tpu.vector_store %arg14[%c10, %c0_12], %10 {strides = array<i32>} : memref<16x24xf32, #tpu.memory_space<vmem>>, vector<4x6xf32>,
    %c20 = arith.constant 20 : index
    %c0_13 = arith.constant 0 : index
    %12 = vector.load %arg1[%c20, %c0_13] : memref<32x6xf32, #tpu.memory_space<vmem>>, vector<4x6xf32>
    %c10_14 = arith.constant 10 : index
    %c6_15 = arith.constant 6 : index
    %13 = vector.load %arg14[%c10_14, %c6_15] : memref<16x24xf32, #tpu.memory_space<vmem>>, vector<4x6xf32>
    tpu.vector_store %arg14[%c10_14, %c6_15], %12 {strides = array<i32>} : memref<16x24xf32, #tpu.memory_space<vmem>>, vector<4x6xf32>,
    %c24 = arith.constant 24 : index
    %c0_16 = arith.constant 0 : index
    %14 = vector.load %arg1[%c24, %c0_16] : memref<32x6xf32, #tpu.memory_space<vmem>>, vector<4x6xf32>
    %c10_17 = arith.constant 10 : index
    %c12_18 = arith.constant 12 : index
    %15 = vector.load %arg14[%c10_17, %c12_18] : memref<16x24xf32, #tpu.memory_space<vmem>>, vector<4x6xf32>
    tpu.vector_store %arg14[%c10_17, %c12_18], %14 {strides = array<i32>} : memref<16x24xf32, #tpu.memory_space<vmem>>, vector<4x6xf32>,
    %c28 = arith.constant 28 : index
    %c0_19 = arith.constant 0 : index
    %16 = vector.load %arg1[%c28, %c0_19] : memref<32x6xf32, #tpu.memory_space<vmem>>, vector<4x6xf32>
    %c10_20 = arith.constant 10 : index
    %c18_21 = arith.constant 18 : index
    %17 = vector.load %arg14[%c10_20, %c18_21] : memref<16x24xf32, #tpu.memory_space<vmem>>, vector<4x6xf32>
    tpu.vector_store %arg14[%c10_20, %c18_21], %16 {strides = array<i32>} : memref<16x24xf32, #tpu.memory_space<vmem>>, vector<4x6xf32>,
    %c0_22 = arith.constant 0 : index
    %c0_23 = arith.constant 0 : index
    %18 = vector.load %arg14[%c0_22, %c0_23] : memref<16x24xf32, #tpu.memory_space<vmem>>, vector<15x24xf32>
    %19 = arith.truncf %18 : vector<15x24xf32> to vector<15x24xbf16>
    %c0_24 = arith.constant 0 : index
    %c0_25 = arith.constant 0 : index
    %20 = vector.load %arg2[%c0_24, %c0_25] : memref<24x112xbf16, #tpu.memory_space<vmem>>, vector<24x112xbf16>
    %cst_26 = arith.constant dense<0.000000e+00> : vector<15x112xf32>
    %21 = tpu.matmul %19, %20, %cst_26 {dimension_numbers = #tpu.dot_dimension_numbers<[1], [0], [0], [1], [0, 0, 1, 1], [], []>} : vector<15x24xbf16>, vector<24x112xbf16>, vector<15x112xf32> -> vector<15x112xf32>
    %c1 = arith.constant 1 : index
    %c0_27 = arith.constant 0 : index
    %22 = vector.load %arg14[%c1, %c0_27] : memref<16x24xf32, #tpu.memory_space<vmem>>, vector<15x24xf32>
    %23 = arith.truncf %22 : vector<15x24xf32> to vector<15x24xbf16>
    %c0_28 = arith.constant 0 : index
    %c0_29 = arith.constant 0 : index
    %24 = vector.load %arg3[%c0_28, %c0_29] : memref<24x112xbf16, #tpu.memory_space<vmem>>, vector<24x112xbf16>
    %cst_30 = arith.constant dense<0.000000e+00> : vector<15x112xf32>
    %25 = tpu.matmul %23, %24, %cst_30 {dimension_numbers = #tpu.dot_dimension_numbers<[1], [0], [0], [1], [0, 0, 1, 1], [], []>} : vector<15x24xbf16>, vector<24x112xbf16>, vector<15x112xf32> -> vector<15x112xf32>
    %26 = arith.addf %21, %25 : vector<15x112xf32>
    %c0_31 = arith.constant 0 : index
    %c0_32 = arith.constant 0 : index
    %27 = vector.load %arg4[%c0_31, %c0_32] : memref<1x112xf32, #tpu.memory_space<vmem>>, vector<1x112xf32>
    %28 = vector.broadcast %27 : vector<1x112xf32> to vector<15x112xf32>
    %29 = arith.addf %26, %28 : vector<15x112xf32>
    %cst_33 = arith.constant 0.000000e+00 : f32
    %30 = vector.broadcast %cst_33 : f32 to vector<15x112xf32>
    %31 = arith.maximumf %29, %30 : vector<15x112xf32>
    %c0_34 = arith.constant 0 : index
    %c0_35 = arith.constant 0 : index
    %32 = vector.load %arg12[%c0_34, %c0_35] : memref<15x1xf32, #tpu.memory_space<vmem>>, vector<15x1xf32>
    %33 = vector.broadcast %32 : vector<15x1xf32> to vector<15x112xf32>
    %34 = arith.mulf %31, %33 : vector<15x112xf32>
    %c0_36 = arith.constant 0 : index
    %c0_37 = arith.constant 0 : index
    %35 = vector.load %arg15[%c0_36, %c0_37] : memref<16x112xf32, #tpu.memory_space<vmem>>, vector<15x112xf32>
    tpu.vector_store %arg15[%c0_36, %c0_37], %34 {strides = array<i32>} : memref<16x112xf32, #tpu.memory_space<vmem>>, vector<15x112xf32>,
    %c0_38 = arith.constant 0 : index
    %c0_39 = arith.constant 0 : index
    %36 = vector.load %arg15[%c0_38, %c0_39] : memref<16x112xf32, #tpu.memory_space<vmem>>, vector<14x112xf32>
    %37 = arith.truncf %36 : vector<14x112xf32> to vector<14x112xbf16>
    %c0_40 = arith.constant 0 : index
    %c0_41 = arith.constant 0 : index
    %38 = vector.load %arg5[%c0_40, %c0_41] : memref<112x256xbf16, #tpu.memory_space<vmem>>, vector<112x256xbf16>
    %cst_42 = arith.constant dense<0.000000e+00> : vector<14x256xf32>
    %39 = tpu.matmul %37, %38, %cst_42 {dimension_numbers = #tpu.dot_dimension_numbers<[1], [0], [0], [1], [0, 0, 1, 1], [], []>} : vector<14x112xbf16>, vector<112x256xbf16>, vector<14x256xf32> -> vector<14x256xf32>
    %c1_43 = arith.constant 1 : index
    %c0_44 = arith.constant 0 : index
    %40 = vector.load %arg15[%c1_43, %c0_44] : memref<16x112xf32, #tpu.memory_space<vmem>>, vector<14x112xf32>
    %41 = arith.truncf %40 : vector<14x112xf32> to vector<14x112xbf16>
    %c0_45 = arith.constant 0 : index
    %c0_46 = arith.constant 0 : index
    %42 = vector.load %arg6[%c0_45, %c0_46] : memref<112x256xbf16, #tpu.memory_space<vmem>>, vector<112x256xbf16>
    %cst_47 = arith.constant dense<0.000000e+00> : vector<14x256xf32>
    %43 = tpu.matmul %41, %42, %cst_47 {dimension_numbers = #tpu.dot_dimension_numbers<[1], [0], [0], [1], [0, 0, 1, 1], [], []>} : vector<14x112xbf16>, vector<112x256xbf16>, vector<14x256xf32> -> vector<14x256xf32>
    %44 = arith.addf %39, %43 : vector<14x256xf32>
    %c0_48 = arith.constant 0 : index
    %c0_49 = arith.constant 0 : index
    %45 = vector.load %arg7[%c0_48, %c0_49] : memref<1x256xf32, #tpu.memory_space<vmem>>, vector<1x256xf32>
    %46 = vector.broadcast %45 : vector<1x256xf32> to vector<14x256xf32>
    %47 = arith.addf %44, %46 : vector<14x256xf32>
    %cst_50 = arith.constant 0.000000e+00 : f32
    %48 = vector.broadcast %cst_50 : f32 to vector<14x256xf32>
    %49 = arith.maximumf %47, %48 : vector<14x256xf32>
    %50 = vector.extract_strided_slice %49 {offsets = [0, 0], sizes = [14, 224], strides = [1, 1]} : vector<14x256xf32> to vector<14x224xf32>
    %51 = vector.extract_strided_slice %49 {offsets = [0, 32], sizes = [14, 224], strides = [1, 1]} : vector<14x256xf32> to vector<14x224xf32>
    %52 = arith.maximumf %50, %51 : vector<14x224xf32>
    %c0_51 = arith.constant 0 : index
    %c0_52 = arith.constant 0 : index
    %53 = vector.load %arg16[%c0_51, %c0_52] : memref<16x256xf32, #tpu.memory_space<vmem>>, vector<14x224xf32>
    tpu.vector_store %arg16[%c0_51, %c0_52], %52 {strides = array<i32>} : memref<16x256xf32, #tpu.memory_space<vmem>>, vector<14x224xf32>,
    %cst_53 = arith.constant 0.000000e+00 : f32
    %54 = vector.broadcast %cst_53 : f32 to vector<16x32xf32>
    %c0_54 = arith.constant 0 : index
    %c224 = arith.constant 224 : index
    %55 = vector.load %arg16[%c0_54, %c224] : memref<16x256xf32, #tpu.memory_space<vmem>>, vector<16x32xf32>
    tpu.vector_store %arg16[%c0_54, %c224], %54 {strides = array<i32>} : memref<16x256xf32, #tpu.memory_space<vmem>>, vector<16x32xf32>,
    %c0_55 = arith.constant 0 : index
    %c0_56 = arith.constant 0 : index
    %56 = vector.load %arg16[%c0_55, %c0_56] : memref<16x256xf32, #tpu.memory_space<vmem>>, vector<1x256xf32>
    %c1_57 = arith.constant 1 : index
    %c0_58 = arith.constant 0 : index
    %57 = vector.load %arg16[%c1_57, %c0_58] : memref<16x256xf32, #tpu.memory_space<vmem>>, vector<1x256xf32>
    %58 = arith.maximumf %56, %57 : vector<1x256xf32>
    %c2_59 = arith.constant 2 : index
    %c0_60 = arith.constant 0 : index
    %59 = vector.load %arg16[%c2_59, %c0_60] : memref<16x256xf32, #tpu.memory_space<vmem>>, vector<1x256xf32>
    %c3 = arith.constant 3 : index
    %c0_61 = arith.constant 0 : index
    %60 = vector.load %arg16[%c3, %c0_61] : memref<16x256xf32, #tpu.memory_space<vmem>>, vector<1x256xf32>
    %61 = arith.maximumf %59, %60 : vector<1x256xf32>
    %c4_62 = arith.constant 4 : index
    %c0_63 = arith.constant 0 : index
    %62 = vector.load %arg16[%c4_62, %c0_63] : memref<16x256xf32, #tpu.memory_space<vmem>>, vector<1x256xf32>
    %c5 = arith.constant 5 : index
    %c0_64 = arith.constant 0 : index
    %63 = vector.load %arg16[%c5, %c0_64] : memref<16x256xf32, #tpu.memory_space<vmem>>, vector<1x256xf32>
    %64 = arith.maximumf %62, %63 : vector<1x256xf32>
    %65 = tpu.concatenate %58, %61, %64 in 1 : vector<1x256xf32>, vector<1x256xf32>, vector<1x256xf32> -> vector<1x768xf32>
    %c8_65 = arith.constant 8 : index
    %c0_66 = arith.constant 0 : index
    %66 = vector.load %arg16[%c8_65, %c0_66] : memref<16x256xf32, #tpu.memory_space<vmem>>, vector<1x256xf32>
    %c9 = arith.constant 9 : index
    %c0_67 = arith.constant 0 : index
    %67 = vector.load %arg16[%c9, %c0_67] : memref<16x256xf32, #tpu.memory_space<vmem>>, vector<1x256xf32>
    %68 = arith.maximumf %66, %67 : vector<1x256xf32>
    %c10_68 = arith.constant 10 : index
    %c0_69 = arith.constant 0 : index
    %69 = vector.load %arg16[%c10_68, %c0_69] : memref<16x256xf32, #tpu.memory_space<vmem>>, vector<1x256xf32>
    %c11 = arith.constant 11 : index
    %c0_70 = arith.constant 0 : index
    %70 = vector.load %arg16[%c11, %c0_70] : memref<16x256xf32, #tpu.memory_space<vmem>>, vector<1x256xf32>
    %71 = arith.maximumf %69, %70 : vector<1x256xf32>
    %c12_71 = arith.constant 12 : index
    %c0_72 = arith.constant 0 : index
    %72 = vector.load %arg16[%c12_71, %c0_72] : memref<16x256xf32, #tpu.memory_space<vmem>>, vector<1x256xf32>
    %c13 = arith.constant 13 : index
    %c0_73 = arith.constant 0 : index
    %73 = vector.load %arg16[%c13, %c0_73] : memref<16x256xf32, #tpu.memory_space<vmem>>, vector<1x256xf32>
    %74 = arith.maximumf %72, %73 : vector<1x256xf32>
    %75 = tpu.concatenate %68, %71, %74 in 1 : vector<1x256xf32>, vector<1x256xf32>, vector<1x256xf32> -> vector<1x768xf32>
    %76 = tpu.concatenate %65, %75 in 0 : vector<1x768xf32>, vector<1x768xf32> -> vector<2x768xf32>
    %77 = arith.truncf %76 : vector<2x768xf32> to vector<2x768xbf16>
    %c0_74 = arith.constant 0 : index
    %c0_75 = arith.constant 0 : index
    %78 = vector.load %arg8[%c0_74, %c0_75] : memref<768x256xbf16, #tpu.memory_space<vmem>>, vector<768x256xbf16>
    %cst_76 = arith.constant dense<0.000000e+00> : vector<2x256xf32>
    %79 = tpu.matmul %77, %78, %cst_76 {dimension_numbers = #tpu.dot_dimension_numbers<[1], [0], [0], [1], [0, 0, 1, 1], [], []>} : vector<2x768xbf16>, vector<768x256xbf16>, vector<2x256xf32> -> vector<2x256xf32>
    %c0_77 = arith.constant 0 : index
    %c0_78 = arith.constant 0 : index
    %80 = vector.load %arg9[%c0_77, %c0_78] : memref<1x256xf32, #tpu.memory_space<vmem>>, vector<1x256xf32>
    %81 = vector.broadcast %80 : vector<1x256xf32> to vector<2x256xf32>
    %82 = arith.addf %79, %81 : vector<2x256xf32>
    %cst_79 = arith.constant 0.000000e+00 : f32
    %83 = vector.broadcast %cst_79 : f32 to vector<2x256xf32>
    %84 = arith.maximumf %82, %83 : vector<2x256xf32>
    %85 = arith.truncf %84 : vector<2x256xf32> to vector<2x256xbf16>
    %c0_80 = arith.constant 0 : index
    %c0_81 = arith.constant 0 : index
    %86 = vector.load %arg10[%c0_80, %c0_81] : memref<256x8xbf16, #tpu.memory_space<vmem>>, vector<256x8xbf16>
    %cst_82 = arith.constant dense<0.000000e+00> : vector<2x8xf32>
    %87 = tpu.matmul %85, %86, %cst_82 {dimension_numbers = #tpu.dot_dimension_numbers<[1], [0], [0], [1], [0, 0, 1, 1], [], []>} : vector<2x256xbf16>, vector<256x8xbf16>, vector<2x8xf32> -> vector<2x8xf32>
    %c0_83 = arith.constant 0 : index
    %c0_84 = arith.constant 0 : index
    %88 = vector.load %arg11[%c0_83, %c0_84] : memref<1x8xf32, #tpu.memory_space<vmem>>, vector<1x8xf32>
    %89 = vector.broadcast %88 : vector<1x8xf32> to vector<2x8xf32>
    %90 = arith.addf %87, %89 : vector<2x8xf32>
    %c0_85 = arith.constant 0 : index
    %c0_86 = arith.constant 0 : index
    %91 = vector.load %arg13[%c0_85, %c0_86] : memref<2x8xf32, #tpu.memory_space<vmem>>, vector<2x8xf32>
    tpu.vector_store %arg13[%c0_85, %c0_86], %90 {strides = array<i32>} : memref<2x8xf32, #tpu.memory_space<vmem>>, vector<2x8xf32>,
    return
  }
  func.func @transform_0(%arg0: i32) -> (i32, i32) {
    %c0_i32 = arith.constant 0 : i32
    %c0_i32_0 = arith.constant 0 : i32
    %c0_i32_1 = arith.constant 0 : i32
    return %c0_i32, %c0_i32_0 : i32, i32
  }
  func.func @transform_1(%arg0: i32) -> (i32, i32) {
    %c0_i32 = arith.constant 0 : i32
    %c0_i32_0 = arith.constant 0 : i32
    %c0_i32_1 = arith.constant 0 : i32
    return %c0_i32, %c0_i32_0 : i32, i32
  }
  func.func @transform_2(%arg0: i32) -> (i32, i32) {
    %c0_i32 = arith.constant 0 : i32
    %c0_i32_0 = arith.constant 0 : i32
    %c0_i32_1 = arith.constant 0 : i32
    return %c0_i32, %c0_i32_0 : i32, i32
  }
  func.func @transform_3(%arg0: i32) -> (i32, i32) {
    %c0_i32 = arith.constant 0 : i32
    %c0_i32_0 = arith.constant 0 : i32
    %c0_i32_1 = arith.constant 0 : i32
    return %c0_i32, %c0_i32_0 : i32, i32
  }
  func.func @transform_4(%arg0: i32) -> (i32, i32) {
    %c0_i32 = arith.constant 0 : i32
    %c0_i32_0 = arith.constant 0 : i32
    %c0_i32_1 = arith.constant 0 : i32
    return %c0_i32, %c0_i32_0 : i32, i32
  }
  func.func @transform_5(%arg0: i32) -> (i32, i32) {
    %c0_i32 = arith.constant 0 : i32
    %c0_i32_0 = arith.constant 0 : i32
    %c0_i32_1 = arith.constant 0 : i32
    return %c0_i32, %c0_i32_0 : i32, i32
  }
  func.func @transform_6(%arg0: i32) -> (i32, i32) {
    %c0_i32 = arith.constant 0 : i32
    %c0_i32_0 = arith.constant 0 : i32
    %c0_i32_1 = arith.constant 0 : i32
    return %c0_i32, %c0_i32_0 : i32, i32
  }
  func.func @transform_7(%arg0: i32) -> (i32, i32) {
    %c0_i32 = arith.constant 0 : i32
    %c0_i32_0 = arith.constant 0 : i32
    %c0_i32_1 = arith.constant 0 : i32
    return %c0_i32, %c0_i32_0 : i32, i32
  }
  func.func @transform_8(%arg0: i32) -> (i32, i32) {
    %c0_i32 = arith.constant 0 : i32
    %c0_i32_0 = arith.constant 0 : i32
    %c0_i32_1 = arith.constant 0 : i32
    return %c0_i32, %c0_i32_0 : i32, i32
  }
  func.func @transform_9(%arg0: i32) -> (i32, i32) {
    %c0_i32 = arith.constant 0 : i32
    %c0_i32_0 = arith.constant 0 : i32
    %c0_i32_1 = arith.constant 0 : i32
    return %c0_i32, %c0_i32_0 : i32, i32
  }
  func.func @transform_10(%arg0: i32) -> (i32, i32) {
    %c0_i32 = arith.constant 0 : i32
    %c0_i32_0 = arith.constant 0 : i32
    %c0_i32_1 = arith.constant 0 : i32
    return %c0_i32, %c0_i32_0 : i32, i32
  }
  func.func @transform_11(%arg0: i32) -> (i32, i32) {
    %c0_i32 = arith.constant 0 : i32
    %c0_i32_0 = arith.constant 0 : i32
    %c0_i32_1 = arith.constant 0 : i32
    return %c0_i32, %c0_i32_0 : i32, i32
  }
  func.func @transform_12(%arg0: i32) -> (i32, i32) {
    %c0_i32 = arith.constant 0 : i32
    %c0_i32_0 = arith.constant 0 : i32
    %c0_i32_1 = arith.constant 0 : i32
    return %c0_i32, %c0_i32_0 : i32, i32
  }
}

</mosaic_0001>

<llo_original>
// kernel: cnn_forward.1
$region0: #{cnn_forward.1}
  #allocation0 [shape = 'u32[]', space=smem, size = 0x4, offset = 0x4, fixed_abs, tag = 'smem constant byte address 0x4 - core index']
  #allocation1 [shape = 'u32[144,128]{1,0:T(1,128)}', space=vmem, size = 0x12000, scoped, tag = 'internal scratch']
  #allocation2 [shape = 'f32[16,24]{1,0:T(8,128)}', space=vmem, size = 0x2000, scoped, tag = 'scratch operand']
  #allocation3 [shape = 'f32[16,112]{1,0:T(8,128)}', space=vmem, size = 0x2000, scoped, tag = 'scratch operand']
  #allocation4 [shape = 'f32[16,256]{1,0:T(8,128)}', space=vmem, size = 0x4000, scoped, tag = 'scratch operand']
  %s0 = inlined_call_operand.vmem [shape: f32[32,6], index: 0, kind: input, shape index: {}]
  %s1 = inlined_call_operand.vmem [shape: bf16[24,112], index: 1, kind: input, shape index: {}]
  %s2 = inlined_call_operand.vmem [shape: bf16[24,112], index: 2, kind: input, shape index: {}]
  %s3 = inlined_call_operand.vmem [shape: f32[1,112], index: 3, kind: input, shape index: {}]
  %s4 = inlined_call_operand.vmem [shape: bf16[112,256], index: 4, kind: input, shape index: {}]
  %s5 = inlined_call_operand.hbm [shape: bf16[112,256], index: 5, kind: input, shape index: {}]
  %s6 = inlined_call_operand.vmem [shape: f32[1,256], index: 6, kind: input, shape index: {}]
  %s7 = inlined_call_operand.hbm [shape: bf16[768,256], index: 7, kind: input, shape index: {}]
  %s8 = inlined_call_operand.vmem [shape: f32[1,256], index: 8, kind: input, shape index: {}]
  %s9 = inlined_call_operand.vmem [shape: bf16[256,8], index: 9, kind: input, shape index: {}]
  %s10 = inlined_call_operand.vmem [shape: f32[1,8], index: 10, kind: input, shape index: {}]
  %s11 = inlined_call_operand.vmem [shape: f32[15,1], index: 11, kind: input, shape index: {}]
  %s12 = inlined_call_operand.hbm [shape: f32[2,8], index: 12, kind: output, shape index: {}]
  %s13 = sld [smem:[#allocation0]]
  $region66: #{cnn_forward.1} parent=0
    _
  %s15 = ssub.s32 1, %s13
  %s16 = scalar_select 0, %s15, %s13
  $region1: #{cnn_forward.1} parent=0
    #allocation5 [shape = 'u8[57344]{0}', space=vmem, size = 0xe000, scoped, tag = 'input window, operand 5, single buffered']
    #allocation6 [shape = 's32[1]{0}', space=sflag, size = 0x4, scoped, tag = 'scoped memory for cnn_forward.1']
    #allocation7 [shape = 's32[1]{0}', space=sflag, size = 0x4, scoped, tag = 'scoped memory for cnn_forward.1']
    #allocation8 [shape = 'u8[393216]{0}', space=vmem, size = 0x60000, scoped, tag = 'input window, operand 7, single buffered']
    #allocation9 [shape = 's32[1]{0}', space=sflag, size = 0x4, scoped, tag = 'scoped memory for cnn_forward.1']
    #allocation10 [shape = 'u8[1024]{0}', space=vmem, size = 0x400, scoped, tag = 'output window, operand 0, single buffered']
    %17 = vsyncpa [#allocation6], 0
    %18 = vsyncpa [#allocation9], 0
    %19 = vsyncpa [#allocation7], 0
    // Predicated region
    $region2: #{cnn_forward.1} parent=1 // pred_check
      _
    $region3: #{cnn_forward.1} parent=1 // pred_check_branch
      %21 = sbr.rel (0) target = $region5
    $region4: #{cnn_forward.1} parent=1 // pred_region
      _
    $region5: #{cnn_forward.1} parent=1 // pred_fallthru
      _
    // Predicated region
    $region6: #{cnn_forward.1} parent=1 // pred_check
      _
    $region7: #{cnn_forward.1} parent=1 // pred_check_branch
      %23 = sbr.rel (0) target = $region9
    $region8: #{cnn_forward.1} parent=1 // pred_region
      _
    $region9: #{cnn_forward.1} parent=1 // pred_fallthru
      _
    // Predicated region
    $region10: #{cnn_forward.1} parent=1 // pred_check
      _
    $region11: #{cnn_forward.1} parent=1 // pred_check_branch
      %25 = sbr.rel (0) target = $region13
    $region12: #{cnn_forward.1} parent=1 // pred_region
      _
    $region13: #{cnn_forward.1} parent=1 // pred_fallthru
      _
    // Predicated region
    $region14: #{cnn_forward.1} parent=1 // pred_check
      _
    $region15: #{cnn_forward.1} parent=1 // pred_check_branch
      %27 = sbr.rel (0) target = $region17
    $region16: #{cnn_forward.1} parent=1 // pred_region
      _
    $region17: #{cnn_forward.1} parent=1 // pred_fallthru
      _
    // Predicated region
    $region18: #{cnn_forward.1} parent=1 // pred_check
      _
    $region19: #{cnn_forward.1} parent=1 // pred_check_branch
      %29 = sbr.rel (0) target = $region21
    $region20: #{cnn_forward.1} parent=1 // pred_region
      _
    $region21: #{cnn_forward.1} parent=1 // pred_fallthru
      _
    // Predicated region
    $region22: #{cnn_forward.1} parent=1 // pred_check
      _
    $region23: #{cnn_forward.1} parent=1 // pred_check_branch
      %31 = sbr.rel (0) target = $region25
    $region24: #{cnn_forward.1} parent=1 // pred_region
      %s33 = ssub.s32 1792, 1792
      %34 = vsyncadd [#allocation6], %s33
      %s35 = sshll.u32 [#allocation5], 4
      %s36 = int_to_ptr.vmem [resolvable:$true] %s35
      %41 = dma.hbm_to_vmem [thread:$0]  %s5, 1792, %s36, [#allocation6], 128, 128, 8
    $region25: #{cnn_forward.1} parent=1 // pred_fallthru
      _
    // Predicated region
    $region26: #{cnn_forward.1} parent=1 // pred_check
      _
    $region27: #{cnn_forward.1} parent=1 // pred_check_branch
      %43 = sbr.rel (0) target = $region29
    $region28: #{cnn_forward.1} parent=1 // pred_region
      _
    $region29: #{cnn_forward.1} parent=1 // pred_fallthru
      _
    // Predicated region
    $region30: #{cnn_forward.1} parent=1 // pred_check
      _
    $region31: #{cnn_forward.1} parent=1 // pred_check_branch
      %45 = sbr.rel (0) target = $region33
    $region32: #{cnn_forward.1} parent=1 // pred_region
      %s47 = ssub.s32 12288, 12288
      %48 = vsyncadd [#allocation9], %s47
      %s49 = sshll.u32 [#allocation8], 4
      %s50 = int_to_ptr.vmem [resolvable:$true] %s49
      %55 = dma.hbm_to_vmem [thread:$0]  %s7, 12288, %s50, [#allocation9], 128, 128, 8
    $region33: #{cnn_forward.1} parent=1 // pred_fallthru
      _
    // Predicated region
    $region34: #{cnn_forward.1} parent=1 // pred_check
      _
    $region35: #{cnn_forward.1} parent=1 // pred_check_branch
      %57 = sbr.rel (0) target = $region37
    $region36: #{cnn_forward.1} parent=1 // pred_region
      _
    $region37: #{cnn_forward.1} parent=1 // pred_fallthru
      _
    // Predicated region
    $region38: #{cnn_forward.1} parent=1 // pred_check
      _
    $region39: #{cnn_forward.1} parent=1 // pred_check_branch
      %59 = sbr.rel (0) target = $region41
    $region40: #{cnn_forward.1} parent=1 // pred_region
      _
    $region41: #{cnn_forward.1} parent=1 // pred_fallthru
      _
    // Predicated region
    $region42: #{cnn_forward.1} parent=1 // pred_check
      _
    $region43: #{cnn_forward.1} parent=1 // pred_check_branch
      %61 = sbr.rel (0) target = $region45
    $region44: #{cnn_forward.1} parent=1 // pred_region
      _
    $region45: #{cnn_forward.1} parent=1 // pred_fallthru
      _
    // Predicated region
    $region46: #{cnn_forward.1} parent=1 // pred_check
      _
    $region47: #{cnn_forward.1} parent=1 // pred_check_branch
      %63 = sbr.rel (0) target = $region49
    $region48: #{cnn_forward.1} parent=1 // pred_region
      _
    $region49: #{cnn_forward.1} parent=1 // pred_fallthru
      _
    // Predicated region
    $region50: #{cnn_forward.1} parent=1 // pred_check
      _
    $region51: #{cnn_forward.1} parent=1 // pred_check_branch
      %65 = sbr.rel (0) target = $region53
    $region52: #{cnn_forward.1} parent=1 // pred_region
      %66 = dma.done [#allocation6], 1792
    $region53: #{cnn_forward.1} parent=1 // pred_fallthru
      _
    // Predicated region
    $region54: #{cnn_forward.1} parent=1 // pred_check
      _
    $region55: #{cnn_forward.1} parent=1 // pred_check_branch
      %68 = sbr.rel (0) target = $region57
    $region56: #{cnn_forward.1} parent=1 // pred_region
      %69 = dma.done [#allocation9], 12288
    $region57: #{cnn_forward.1} parent=1 // pred_fallthru
      _
    %vm71 = vcmask 195584
    %72 = vst.msk [vmem:[#allocation2] sm:$0xff] %vm71, 0.0
    %73 = vst.msk [vmem:[#allocation2 + $0x8] sm:$0xff] %vm71, 0.0
    %v74 = vld [vmem:[%s0] sm:$0xf]
    %vm75 = vcmask 44032
    %76 = vst.msk [vmem:[#allocation2 + $0x2] sm:$0xf] %vm75, %v74
    %v77 = vld [vmem:[%s0 + $0x4] sm:$0xf]
    %79 = vrot.lane.b32.xlu0 %v77, 6
    %v80 = vpop.permute.xlu0 %79
    %vm82 = vcmask 93232
    %83 = vst.msk [vmem:[#allocation2 + $0x2] sm:$0xf] %vm82, %v80
    %v84 = vld [vmem:[%s0 + $0x8] sm:$0xf]
    %86 = vrot.lane.b32.xlu0 %v84, 12
    %v87 = vpop.permute.xlu0 %86
    %vm89 = vcmask 142432
    %90 = vst.msk [vmem:[#allocation2 + $0x2] sm:$0xf] %vm89, %v87
    %v91 = vld [vmem:[%s0 + $0xc] sm:$0xf]
    %93 = vrot.lane.b32.xlu0 %v91, 18
    %v94 = vpop.permute.xlu0 %93
    %vm96 = vcmask 191632
    %97 = vst.msk [vmem:[#allocation2 + $0x2] sm:$0xf] %vm96, %v94
    %v98 = vld [vmem:[%s0 + $0x10] sm:$0xf]
    %99 = vst.msk [vmem:[#allocation2 + $0xa] sm:$0xf] %vm75, %v98
    %v100 = vld [vmem:[%s0 + $0x14] sm:$0xf]
    %102 = vrot.lane.b32.xlu0 %v100, 6
    %v103 = vpop.permute.xlu0 %102
    %105 = vst.msk [vmem:[#allocation2 + $0xa] sm:$0xf] %vm82, %v103
    %v106 = vld [vmem:[%s0 + $0x18] sm:$0xf]
    %108 = vrot.lane.b32.xlu0 %v106, 12
    %v109 = vpop.permute.xlu0 %108
    %111 = vst.msk [vmem:[#allocation2 + $0xa] sm:$0xf] %vm89, %v109
    %v112 = vld [vmem:[%s0 + $0x1c] sm:$0xf]
    %114 = vrot.lane.b32.xlu0 %v112, 18
    %v115 = vpop.permute.xlu0 %114
    %117 = vst.msk [vmem:[#allocation2 + $0xa] sm:$0xf] %vm96, %v115
    %v118 = vld [vmem:[#allocation2] sm:$0xff]
    %v119 = vld [vmem:[#allocation2 + $0x8] sm:$0x7f]
    %v120 = vpack.c.bf16 %v119, %v118
    %v121 = vld [vmem:[%s1] sm:$0xf]
    %v122 = vld [vmem:[%s1 + $0x4] sm:$0xf]
    %v123 = vld [vmem:[%s1 + $0x8] sm:$0xf]
    %v124 = vld [vmem:[#allocation2 + $0x1] sm:$0xff]
    %v125 = vld [vmem:[#allocation2 + $0x9] sm:$0x7f]
    %v126 = vpack.c.bf16 %v125, %v124
    %v127 = vld [vmem:[%s2] sm:$0xf]
    %v128 = vld [vmem:[%s2 + $0x4] sm:$0xf]
    %v129 = vld [vmem:[%s2 + $0x8] sm:$0xf]
    %v133 = vunpack.c.l.b16 %v127
    %v134 = vunpack.c.l.b16 %v128
    %v135 = vunpack.c.l.b16 %v129
    %v136 = vpack.c.b16 %v134, %v133
    %v137 = vpack.c.b16 %v135, %v135
    %v140 = vsel %vm71, %v126, 0
    %vm142 = vcmask 1043456
    %v144 = vsel %vm142, %v137, 0
    %146 = vmatprep.subr.bf16.mxu0 0
    %147 = vmatpush1.bf16.msra.mxu0 %v136
    %148 = vmatprep.subr.bf16.mxu0 0
    %149 = vmatpush1.bf16.msra.mxu0 %v144
    %150 = vmatprep.subr.bf16.mxu0 0
    %151 = vmatpush1.bf16.msra.mxu0 0
    %152 = vmatprep.subr.bf16.mxu0 0
    %153 = vmatpush1.bf16.msra.mxu0 0
    %154 = vmatprep.subr.bf16.mxu0 0
    %155 = vmatpush1.bf16.msra.mxu0 0
    %156 = vmatprep.subr.bf16.mxu0 0
    %157 = vmatpush1.bf16.msra.mxu0 0
    %158 = vmatprep.subr.bf16.mxu0 0
    %159 = vmatpush1.bf16.msra.mxu0 0
    %160 = vmatprep.subr.bf16.mxu0 0
    %161 = vmatpush1.bf16.msra.mxu0 0
    %162 = vmatprep.subr.bf16.mxu0 0
    %163 = vmatpush1.bf16.msra.mxu0 0
    %164 = vmatprep.subr.bf16.mxu0 0
    %165 = vmatpush1.bf16.msra.mxu0 0
    %166 = vmatprep.subr.bf16.mxu0 0
    %167 = vmatpush1.bf16.msra.mxu0 0
    %168 = vmatprep.subr.bf16.mxu0 0
    %169 = vmatpush1.bf16.msra.mxu0 0
    %170 = vmatprep.subr.bf16.mxu0 0
    %171 = vmatpush1.bf16.msra.mxu0 0
    %172 = vmatprep.subr.bf16.mxu0 0
    %173 = vmatpush1.bf16.msra.mxu0 0
    %174 = vmatprep.subr.bf16.mxu0 0
    %175 = vmatpush1.bf16.msra.mxu0 0
    %176 = vmatprep.subr.bf16.mxu0 0
    %177 = vmatpush1.bf16.msra.mxu0 0
    %178 = vmatprep.mubr.bf16.mxu0 0
    %179 = vmatmul.mubr.bf16.gmra.mrb[0].mxu0 %v140
    %v180 = vpop.f32.mrb[0].mxu0
    %v181 = vadd.f32 0.0, %v180
    %v182 = vpop.f32.mrb[0].mxu0
    %v183 = vpop.f32.mrb[0].mxu0
    %v184 = vadd.f32 0.0, %v183
    %v185 = vpop.f32.mrb[0].mxu0
    %186 = vdwg.mxu0
    %v190 = vunpack.c.l.b16 %v121
    %v191 = vunpack.c.l.b16 %v122
    %v192 = vunpack.c.l.b16 %v123
    %v193 = vpack.c.b16 %v191, %v190
    %v194 = vpack.c.b16 %v192, %v192
    %v197 = vsel %vm71, %v120, 0
    %v200 = vsel %vm142, %v194, 0
    %202 = vmatprep.subr.bf16.mxu0 0
    %203 = vmatpush1.bf16.msra.mxu0 %v193
    %204 = vmatprep.subr.bf16.mxu0 0
    %205 = vmatpush1.bf16.msra.mxu0 %v200
    %206 = vmatprep.subr.bf16.mxu0 0
    %207 = vmatpush1.bf16.msra.mxu0 0
    %208 = vmatprep.subr.bf16.mxu0 0
    %209 = vmatpush1.bf16.msra.mxu0 0
    %210 = vmatprep.subr.bf16.mxu0 0
    %211 = vmatpush1.bf16.msra.mxu0 0
    %212 = vmatprep.subr.bf16.mxu0 0
    %213 = vmatpush1.bf16.msra.mxu0 0
    %214 = vmatprep.subr.bf16.mxu0 0
    %215 = vmatpush1.bf16.msra.mxu0 0
    %216 = vmatprep.subr.bf16.mxu0 0
    %217 = vmatpush1.bf16.msra.mxu0 0
    %218 = vmatprep.subr.bf16.mxu0 0
    %219 = vmatpush1.bf16.msra.mxu0 0
    %220 = vmatprep.subr.bf16.mxu0 0
    %221 = vmatpush1.bf16.msra.mxu0 0
    %222 = vmatprep.subr.bf16.mxu0 0
    %223 = vmatpush1.bf16.msra.mxu0 0
    %224 = vmatprep.subr.bf16.mxu0 0
    %225 = vmatpush1.bf16.msra.mxu0 0
    %226 = vmatprep.subr.bf16.mxu0 0
    %227 = vmatpush1.bf16.msra.mxu0 0
    %228 = vmatprep.subr.bf16.mxu0 0
    %229 = vmatpush1.bf16.msra.mxu0 0
    %230 = vmatprep.subr.bf16.mxu0 0
    %231 = vmatpush1.bf16.msra.mxu0 0
    %232 = vmatprep.subr.bf16.mxu0 0
    %233 = vmatpush1.bf16.msra.mxu0 0
    %234 = vmatprep.mubr.bf16.mxu0 0
    %235 = vmatmul.mubr.bf16.gmra.mrb[0].mxu0 %v197
    %v236 = vpop.f32.mrb[0].mxu0
    %v237 = vadd.f32 %v181, %v236
    %v238 = vpop.f32.mrb[0].mxu0
    %v239 = vpop.f32.mrb[0].mxu0
    %v240 = vadd.f32 %v184, %v239
    %v241 = vpop.f32.mrb[0].mxu0
    %242 = vdwg.mxu0
    %v243 = vld [vmem:[%s3] sm:$0x1]
    %v245 = vlaneseq
    %v246 = vshrl.u32 %v245, 7
    %v247 = vsub.s32 0, %v246
    %v248 = vrot.slane %v243, %v247
    %v250 = vadd.f32 %v237, %v248
    %v251 = vadd.f32 %v240, %v248
    %v252 = vmax.f32 %v250, 0.0
    %v253 = vmax.f32 %v251, 0.0
    %v254 = vld [vmem:[%s11] sm:$0xff]
    %v255 = vld [vmem:[%s11 + $0x8] sm:$0x7f]
    %257 = vset.pattern.permute.xlu0 0
    %258 = vperm.xlu0 %257, %v254
    %v259 = vpop.permute.xlu0 %258
    %262 = vset.pattern.permute.xlu0 0
    %263 = vperm.xlu0 %262, %v255
    %v264 = vpop.permute.xlu0 %263
    %v266 = vmul.f32 %v252, %v259
    %v267 = vmul.f32 %v253, %v264
    %vm268 = vcmask 916480
    %269 = vst.msk [vmem:[#allocation3] sm:$0xff] %vm268, %v266
    %vm270 = vcmask 915456
    %271 = vst.msk [vmem:[#allocation3 + $0x8] sm:$0x7f] %vm270, %v267
    %v272 = vld [vmem:[#allocation3] sm:$0xff]
    %v273 = vld [vmem:[#allocation3 + $0x8] sm:$0x3f]
    %v274 = vpack.c.bf16 %v273, %v272
    %v275 = vld [vmem:[%s4] sm:$0xff]
    %v276 = vld [vmem:[%s4 + $0x8] sm:$0xff]
    %v277 = vld [vmem:[%s4 + $0x10] sm:$0xff]
    %v278 = vld [vmem:[%s4 + $0x18] sm:$0xff]
    %v279 = vld [vmem:[%s4 + $0x20] sm:$0xff]
    %v280 = vld [vmem:[%s4 + $0x28] sm:$0xff]
    %v281 = vld [vmem:[%s4 + $0x30] sm:$0xff]
    %v282 = vld [vmem:[%s4 + $0x38] sm:$0xff]
    %v283 = vld [vmem:[%s4 + $0x40] sm:$0xff]
    %v284 = vld [vmem:[%s4 + $0x48] sm:$0xff]
    %v285 = vld [vmem:[%s4 + $0x50] sm:$0xff]
    %v286 = vld [vmem:[%s4 + $0x58] sm:$0xff]
    %v287 = vld [vmem:[%s4 + $0x60] sm:$0xff]
    %v288 = vld [vmem:[%s4 + $0x68] sm:$0xff]
    %v289 = vld [vmem:[#allocation3 + $0x1] sm:$0xff]
    %v290 = vld [vmem:[#allocation3 + $0x9] sm:$0x3f]
    %v291 = vpack.c.bf16 %v290, %v289
    %v292 = vld [vmem:[#allocation5] sm:$0xff]
    %v293 = vld [vmem:[#allocation5 + $0x8] sm:$0xff]
    %v294 = vld [vmem:[#allocation5 + $0x10] sm:$0xff]
    %v295 = vld [vmem:[#allocation5 + $0x18] sm:$0xff]
    %v296 = vld [vmem:[#allocation5 + $0x20] sm:$0xff]
    %v297 = vld [vmem:[#allocation5 + $0x28] sm:$0xff]
    %v298 = vld [vmem:[#allocation5 + $0x30] sm:$0xff]
    %v299 = vld [vmem:[#allocation5 + $0x38] sm:$0xff]
    %v300 = vld [vmem:[#allocation5 + $0x40] sm:$0xff]
    %v301 = vld [vmem:[#allocation5 + $0x48] sm:$0xff]
    %v302 = vld [vmem:[#allocation5 + $0x50] sm:$0xff]
    %v303 = vld [vmem:[#allocation5 + $0x58] sm:$0xff]
    %v304 = vld [vmem:[#allocation5 + $0x60] sm:$0xff]
    %v305 = vld [vmem:[#allocation5 + $0x68] sm:$0xff]
    %v320 = vunpack.c.l.b16 %v292
    %v321 = vunpack.c.h.b16 %v292
    %v322 = vunpack.c.l.b16 %v293
    %v323 = vunpack.c.h.b16 %v293
    %v324 = vunpack.c.l.b16 %v294
    %v325 = vunpack.c.h.b16 %v294
    %v326 = vunpack.c.l.b16 %v295
    %v327 = vunpack.c.h.b16 %v295
    %v328 = vunpack.c.l.b16 %v296
    %v329 = vunpack.c.h.b16 %v296
    %v330 = vunpack.c.l.b16 %v297
    %v331 = vunpack.c.h.b16 %v297
    %v332 = vunpack.c.l.b16 %v298
    %v333 = vunpack.c.h.b16 %v298
    %v334 = vunpack.c.l.b16 %v299
    %v335 = vunpack.c.h.b16 %v299
    %v336 = vunpack.c.l.b16 %v300
    %v337 = vunpack.c.h.b16 %v300
    %v338 = vunpack.c.l.b16 %v301
    %v339 = vunpack.c.h.b16 %v301
    %v340 = vunpack.c.l.b16 %v302
    %v341 = vunpack.c.h.b16 %v302
    %v342 = vunpack.c.l.b16 %v303
    %v343 = vunpack.c.h.b16 %v303
    %v344 = vunpack.c.l.b16 %v304
    %v345 = vunpack.c.h.b16 %v304
    %v346 = vunpack.c.l.b16 %v305
    %v347 = vunpack.c.h.b16 %v305
    %v348 = vpack.c.b16 %v322, %v320
    %v349 = vpack.c.b16 %v323, %v321
    %v350 = vpack.c.b16 %v326, %v324
    %v351 = vpack.c.b16 %v327, %v325
    %v352 = vpack.c.b16 %v330, %v328
    %v353 = vpack.c.b16 %v331, %v329
    %v354 = vpack.c.b16 %v334, %v332
    %v355 = vpack.c.b16 %v335, %v333
    %v356 = vpack.c.b16 %v338, %v336
    %v357 = vpack.c.b16 %v339, %v337
    %v358 = vpack.c.b16 %v342, %v340
    %v359 = vpack.c.b16 %v343, %v341
    %v360 = vpack.c.b16 %v346, %v344
    %v361 = vpack.c.b16 %v347, %v345
    %v377 = vsel %vm268, %v291, 0
    %379 = vmatprep.subr.bf16.mxu0 %v349
    %380 = vmatpush1.bf16.msra.mxu0 %v348
    %381 = vmatprep.subr.bf16.mxu0 %v351
    %382 = vmatpush1.bf16.msra.mxu0 %v350
    %383 = vmatprep.subr.bf16.mxu0 %v353
    %384 = vmatpush1.bf16.msra.mxu0 %v352
    %385 = vmatprep.subr.bf16.mxu0 %v355
    %386 = vmatpush1.bf16.msra.mxu0 %v354
    %387 = vmatprep.subr.bf16.mxu0 %v357
    %388 = vmatpush1.bf16.msra.mxu0 %v356
    %389 = vmatprep.subr.bf16.mxu0 %v359
    %390 = vmatpush1.bf16.msra.mxu0 %v358
    %391 = vmatprep.subr.bf16.mxu0 %v361
    %392 = vmatpush1.bf16.msra.mxu0 %v360
    %393 = vmatprep.subr.bf16.mxu0 0
    %394 = vmatpush1.bf16.msra.mxu0 0
    %395 = vmatprep.subr.bf16.mxu0 0
    %396 = vmatpush1.bf16.msra.mxu0 0
    %397 = vmatprep.subr.bf16.mxu0 0
    %398 = vmatpush1.bf16.msra.mxu0 0
    %399 = vmatprep.subr.bf16.mxu0 0
    %400 = vmatpush1.bf16.msra.mxu0 0
    %401 = vmatprep.subr.bf16.mxu0 0
    %402 = vmatpush1.bf16.msra.mxu0 0
    %403 = vmatprep.subr.bf16.mxu0 0
    %404 = vmatpush1.bf16.msra.mxu0 0
    %405 = vmatprep.subr.bf16.mxu0 0
    %406 = vmatpush1.bf16.msra.mxu0 0
    %407 = vmatprep.subr.bf16.mxu0 0
    %408 = vmatpush1.bf16.msra.mxu0 0
    %409 = vmatprep.subr.bf16.mxu0 0
    %410 = vmatpush1.bf16.msra.mxu0 0
    %411 = vmatprep.mubr.bf16.mxu0 0
    %412 = vmatmul.mubr.bf16.gmra.mrb[0].mxu0 %v377
    %v413 = vpop.f32.mrb[0].mxu0
    %v414 = vadd.f32 0.0, %v413
    %v415 = vpop.f32.mrb[0].mxu0
    %v416 = vadd.f32 0.0, %v415
    %v417 = vpop.f32.mrb[0].mxu0
    %v418 = vadd.f32 0.0, %v417
    %v419 = vpop.f32.mrb[0].mxu0
    %v420 = vadd.f32 0.0, %v419
    %421 = vdwg.mxu0
    %v436 = vunpack.c.l.b16 %v275
    %v437 = vunpack.c.h.b16 %v275
    %v438 = vunpack.c.l.b16 %v276
    %v439 = vunpack.c.h.b16 %v276
    %v440 = vunpack.c.l.b16 %v277
    %v441 = vunpack.c.h.b16 %v277
    %v442 = vunpack.c.l.b16 %v278
    %v443 = vunpack.c.h.b16 %v278
    %v444 = vunpack.c.l.b16 %v279
    %v445 = vunpack.c.h.b16 %v279
    %v446 = vunpack.c.l.b16 %v280
    %v447 = vunpack.c.h.b16 %v280
    %v448 = vunpack.c.l.b16 %v281
    %v449 = vunpack.c.h.b16 %v281
    %v450 = vunpack.c.l.b16 %v282
    %v451 = vunpack.c.h.b16 %v282
    %v452 = vunpack.c.l.b16 %v283
    %v453 = vunpack.c.h.b16 %v283
    %v454 = vunpack.c.l.b16 %v284
    %v455 = vunpack.c.h.b16 %v284
    %v456 = vunpack.c.l.b16 %v285
    %v457 = vunpack.c.h.b16 %v285
    %v458 = vunpack.c.l.b16 %v286
    %v459 = vunpack.c.h.b16 %v286
    %v460 = vunpack.c.l.b16 %v287
    %v461 = vunpack.c.h.b16 %v287
    %v462 = vunpack.c.l.b16 %v288
    %v463 = vunpack.c.h.b16 %v288
    %v464 = vpack.c.b16 %v438, %v436
    %v465 = vpack.c.b16 %v439, %v437
    %v466 = vpack.c.b16 %v442, %v440
    %v467 = vpack.c.b16 %v443, %v441
    %v468 = vpack.c.b16 %v446, %v444
    %v469 = vpack.c.b16 %v447, %v445
    %v470 = vpack.c.b16 %v450, %v448
    %v471 = vpack.c.b16 %v451, %v449
    %v472 = vpack.c.b16 %v454, %v452
    %v473 = vpack.c.b16 %v455, %v453
    %v474 = vpack.c.b16 %v458, %v456
    %v475 = vpack.c.b16 %v459, %v457
    %v476 = vpack.c.b16 %v462, %v460
    %v477 = vpack.c.b16 %v463, %v461
    %v493 = vsel %vm268, %v274, 0
    %495 = vmatprep.subr.bf16.mxu0 %v465
    %496 = vmatpush1.bf16.msra.mxu0 %v464
    %497 = vmatprep.subr.bf16.mxu0 %v467
    %498 = vmatpush1.bf16.msra.mxu0 %v466
    %499 = vmatprep.subr.bf16.mxu0 %v469
    %500 = vmatpush1.bf16.msra.mxu0 %v468
    %501 = vmatprep.subr.bf16.mxu0 %v471
    %502 = vmatpush1.bf16.msra.mxu0 %v470
    %503 = vmatprep.subr.bf16.mxu0 %v473
    %504 = vmatpush1.bf16.msra.mxu0 %v472
    %505 = vmatprep.subr.bf16.mxu0 %v475
    %506 = vmatpush1.bf16.msra.mxu0 %v474
    %507 = vmatprep.subr.bf16.mxu0 %v477
    %508 = vmatpush1.bf16.msra.mxu0 %v476
    %509 = vmatprep.subr.bf16.mxu0 0
    %510 = vmatpush1.bf16.msra.mxu0 0
    %511 = vmatprep.subr.bf16.mxu0 0
    %512 = vmatpush1.bf16.msra.mxu0 0
    %513 = vmatprep.subr.bf16.mxu0 0
    %514 = vmatpush1.bf16.msra.mxu0 0
    %515 = vmatprep.subr.bf16.mxu0 0
    %516 = vmatpush1.bf16.msra.mxu0 0
    %517 = vmatprep.subr.bf16.mxu0 0
    %518 = vmatpush1.bf16.msra.mxu0 0
    %519 = vmatprep.subr.bf16.mxu0 0
    %520 = vmatpush1.bf16.msra.mxu0 0
    %521 = vmatprep.subr.bf16.mxu0 0
    %522 = vmatpush1.bf16.msra.mxu0 0
    %523 = vmatprep.subr.bf16.mxu0 0
    %524 = vmatpush1.bf16.msra.mxu0 0
    %525 = vmatprep.subr.bf16.mxu0 0
    %526 = vmatpush1.bf16.msra.mxu0 0
    %527 = vmatprep.mubr.bf16.mxu0 0
    %528 = vmatmul.mubr.bf16.gmra.mrb[0].mxu0 %v493
    %v529 = vpop.f32.mrb[0].mxu0
    %v530 = vadd.f32 %v414, %v529
    %v531 = vpop.f32.mrb[0].mxu0
    %v532 = vadd.f32 %v416, %v531
    %v533 = vpop.f32.mrb[0].mxu0
    %v534 = vadd.f32 %v418, %v533
    %v535 = vpop.f32.mrb[0].mxu0
    %v536 = vadd.f32 %v420, %v535
    %537 = vdwg.mxu0
    %v538 = vld [vmem:[%s6] sm:$0x3]
    %v540 = vlaneseq
    %v541 = vshrl.u32 %v540, 7
    %v542 = vsub.s32 0, %v541
    %v543 = vrot.slane %v538, %v542
    %v544 = vlaneseq
    %v545 = vshrl.u32 %v544, 7
    %v546 = vsub.s32 1, %v545
    %v547 = vrot.slane %v538, %v546
    %v550 = vadd.f32 %v530, %v543
    %v551 = vadd.f32 %v532, %v547
    %v552 = vadd.f32 %v534, %v543
    %v553 = vadd.f32 %v536, %v547
    %v554 = vmax.f32 %v550, 0.0
    %v555 = vmax.f32 %v551, 0.0
    %v556 = vmax.f32 %v552, 0.0
    %v557 = vmax.f32 %v553, 0.0
    %562 = vrot.lane.b32.xlu0 %v554, 96
    %v563 = vpop.permute.xlu0 %562
    %564 = vrot.lane.b32.xlu0 %v555, 96
    %v565 = vpop.permute.xlu0 %564
    %566 = vrot.lane.b32.xlu0 %v556, 96
    %v567 = vpop.permute.xlu0 %566
    %568 = vrot.lane.b32.xlu0 %v557, 96
    %v569 = vpop.permute.xlu0 %568
    %vm570 = vcmask 785408
    %v571 = vsel %vm570, %v563, %v565
    %v572 = vsel %vm570, %v567, %v569
    %v577 = vmax.f32 %v554, %v571
    %v578 = vmax.f32 %v555, %v565
    %v579 = vmax.f32 %v556, %v572
    %v580 = vmax.f32 %v557, %v569
    %581 = vst [vmem:[#allocation4] sm:$0xff] %v577
    %582 = vst.msk [vmem:[#allocation4 + $0x8] sm:$0xff] %vm570, %v578
    %583 = vst [vmem:[#allocation4 + $0x10] sm:$0x3f] %v579
    %vm584 = vcmask 783360
    %585 = vst.msk [vmem:[#allocation4 + $0x18] sm:$0x3f] %vm584, %v580
    %vm586 = vcmask 1048320
    %587 = vst.msk [vmem:[#allocation4 + $0x8] sm:$0xff] %vm586, 0.0
    %588 = vst.msk [vmem:[#allocation4 + $0x18] sm:$0xff] %vm586, 0.0
    %v589 = vld [vmem:[#allocation4] ss:$8 sm:$0x3]
    %s590 = scalar_lea.vmem [#allocation4], 1
    %v591 = vld [vmem:[%s590] ss:$8 sm:$0x3]
    %v592 = vmax.f32 %v589, %v591
    %s593 = scalar_lea.vmem [#allocation4], 2
    %v594 = vld [vmem:[%s593] ss:$8 sm:$0x3]
    %s595 = scalar_lea.vmem [#allocation4], 3
    %v596 = vld [vmem:[%s595] ss:$8 sm:$0x3]
    %v597 = vmax.f32 %v594, %v596
    %s598 = scalar_lea.vmem [#allocation4], 4
    %v599 = vld [vmem:[%s598] ss:$8 sm:$0x3]
    %s600 = scalar_lea.vmem [#allocation4], 5
    %v601 = vld [vmem:[%s600] ss:$8 sm:$0x3]
    %v602 = vmax.f32 %v599, %v601
    %v604 = vlaneseq
    %v605 = vshrl.u32 %v604, 7
    %v606 = vsub.s32 0, %v605
    %v607 = vrot.slane %v592, %v606
    %v608 = vlaneseq
    %v609 = vshrl.u32 %v608, 7
    %v610 = vsub.s32 1, %v609
    %v611 = vrot.slane %v592, %v610
    %v615 = vlaneseq
    %v616 = vshrl.u32 %v615, 7
    %v617 = vsub.s32 0, %v616
    %v618 = vrot.slane %v597, %v617
    %v619 = vlaneseq
    %v620 = vshrl.u32 %v619, 7
    %v621 = vsub.s32 1, %v620
    %v622 = vrot.slane %v597, %v621
    %v626 = vlaneseq
    %v627 = vshrl.u32 %v626, 7
    %v628 = vsub.s32 0, %v627
    %v629 = vrot.slane %v602, %v628
    %v630 = vlaneseq
    %v631 = vshrl.u32 %v630, 7
    %v632 = vsub.s32 1, %v631
    %v633 = vrot.slane %v602, %v632
    %s636 = scalar_lea.vmem [#allocation4], 16
    %v637 = vld [vmem:[%s636] ss:$8 sm:$0x3]
    %s638 = scalar_lea.vmem [#allocation4], 17
    %v639 = vld [vmem:[%s638] ss:$8 sm:$0x3]
    %v640 = vmax.f32 %v637, %v639
    %s641 = scalar_lea.vmem [#allocation4], 18
    %v642 = vld [vmem:[%s641] ss:$8 sm:$0x3]
    %s643 = scalar_lea.vmem [#allocation4], 19
    %v644 = vld [vmem:[%s643] ss:$8 sm:$0x3]
    %v645 = vmax.f32 %v642, %v644
    %s646 = scalar_lea.vmem [#allocation4], 20
    %v647 = vld [vmem:[%s646] ss:$8 sm:$0x3]
    %s648 = scalar_lea.vmem [#allocation4], 21
    %v649 = vld [vmem:[%s648] ss:$8 sm:$0x3]
    %v650 = vmax.f32 %v647, %v649
    %v652 = vlaneseq
    %v653 = vshrl.u32 %v652, 7
    %v654 = vsub.s32 0, %v653
    %v655 = vrot.slane %v640, %v654
    %v656 = vlaneseq
    %v657 = vshrl.u32 %v656, 7
    %v658 = vsub.s32 1, %v657
    %v659 = vrot.slane %v640, %v658
    %v661 = vlaneseq
    %v662 = vshrl.u32 %v661, 7
    %v663 = vsub.s32 0, %v662
    %v664 = vrot.slane %v645, %v663
    %v665 = vlaneseq
    %v666 = vshrl.u32 %v665, 7
    %v667 = vsub.s32 1, %v666
    %v668 = vrot.slane %v645, %v667
    %v670 = vlaneseq
    %v671 = vshrl.u32 %v670, 7
    %v672 = vsub.s32 0, %v671
    %v673 = vrot.slane %v650, %v672
    %v674 = vlaneseq
    %v675 = vshrl.u32 %v674, 7
    %v676 = vsub.s32 1, %v675
    %v677 = vrot.slane %v650, %v676
    %v678 = vrot.slane %v655, 7
    %v679 = vrot.slane %v659, 7
    %v680 = vrot.slane %v664, 7
    %v681 = vrot.slane %v668, 7
    %v682 = vrot.slane %v673, 7
    %v683 = vrot.slane %v677, 7
    %vm690 = vcmask 1040384
    %v691 = vsel %vm690, %v607, %v678
    %v692 = vsel %vm690, %v611, %v679
    %v693 = vsel %vm690, %v618, %v680
    %v694 = vsel %vm690, %v622, %v681
    %v695 = vsel %vm690, %v629, %v682
    %v696 = vsel %vm690, %v633, %v683
    %v697 = vpack.c.bf16 %v691, %v691
    %v698 = vpack.c.bf16 %v692, %v692
    %v699 = vpack.c.bf16 %v693, %v693
    %v700 = vpack.c.bf16 %v694, %v694
    %v701 = vpack.c.bf16 %v695, %v695
    %v702 = vpack.c.bf16 %v696, %v696
    %v703 = vld [vmem:[#allocation8] sm:$0xff]
    %v704 = vld [vmem:[#allocation8 + $0x8] sm:$0xff]
    %v705 = vld [vmem:[#allocation8 + $0x10] sm:$0xff]
    %v706 = vld [vmem:[#allocation8 + $0x18] sm:$0xff]
    %v707 = vld [vmem:[#allocation8 + $0x20] sm:$0xff]
    %v708 = vld [vmem:[#allocation8 + $0x28] sm:$0xff]
    %v709 = vld [vmem:[#allocation8 + $0x30] sm:$0xff]
    %v710 = vld [vmem:[#allocation8 + $0x38] sm:$0xff]
    %v711 = vld [vmem:[#allocation8 + $0x40] sm:$0xff]
    %v712 = vld [vmem:[#allocation8 + $0x48] sm:$0xff]
    %v713 = vld [vmem:[#allocation8 + $0x50] sm:$0xff]
    %v714 = vld [vmem:[#allocation8 + $0x58] sm:$0xff]
    %v715 = vld [vmem:[#allocation8 + $0x60] sm:$0xff]
    %v716 = vld [vmem:[#allocation8 + $0x68] sm:$0xff]
    %v717 = vld [vmem:[#allocation8 + $0x70] sm:$0xff]
    %v718 = vld [vmem:[#allocation8 + $0x78] sm:$0xff]
    %v719 = vld [vmem:[#allocation8 + $0x80] sm:$0xff]
    %v720 = vld [vmem:[#allocation8 + $0x88] sm:$0xff]
    %v721 = vld [vmem:[#allocation8 + $0x90] sm:$0xff]
    %v722 = vld [vmem:[#allocation8 + $0x98] sm:$0xff]
    %v723 = vld [vmem:[#allocation8 + $0xa0] sm:$0xff]
    %v724 = vld [vmem:[#allocation8 + $0xa8] sm:$0xff]
    %v725 = vld [vmem:[#allocation8 + $0xb0] sm:$0xff]
    %v726 = vld [vmem:[#allocation8 + $0xb8] sm:$0xff]
    %v727 = vld [vmem:[#allocation8 + $0xc0] sm:$0xff]
    %v728 = vld [vmem:[#allocation8 + $0xc8] sm:$0xff]
    %v729 = vld [vmem:[#allocation8 + $0xd0] sm:$0xff]
    %v730 = vld [vmem:[#allocation8 + $0xd8] sm:$0xff]
    %v731 = vld [vmem:[#allocation8 + $0xe0] sm:$0xff]
    %v732 = vld [vmem:[#allocation8 + $0xe8] sm:$0xff]
    %v733 = vld [vmem:[#allocation8 + $0xf0] sm:$0xff]
    %v734 = vld [vmem:[#allocation8 + $0xf8] sm:$0xff]
    %v735 = vld [vmem:[#allocation8 + $0x100] sm:$0xff]
    %v736 = vld [vmem:[#allocation8 + $0x108] sm:$0xff]
    %v737 = vld [vmem:[#allocation8 + $0x110] sm:$0xff]
    %v738 = vld [vmem:[#allocation8 + $0x118] sm:$0xff]
    %v739 = vld [vmem:[#allocation8 + $0x120] sm:$0xff]
    %v740 = vld [vmem:[#allocation8 + $0x128] sm:$0xff]
    %v741 = vld [vmem:[#allocation8 + $0x130] sm:$0xff]
    %v742 = vld [vmem:[#allocation8 + $0x138] sm:$0xff]
    %v743 = vld [vmem:[#allocation8 + $0x140] sm:$0xff]
    %v744 = vld [vmem:[#allocation8 + $0x148] sm:$0xff]
    %v745 = vld [vmem:[#allocation8 + $0x150] sm:$0xff]
    %v746 = vld [vmem:[#allocation8 + $0x158] sm:$0xff]
    %v747 = vld [vmem:[#allocation8 + $0x160] sm:$0xff]
    %v748 = vld [vmem:[#allocation8 + $0x168] sm:$0xff]
    %v749 = vld [vmem:[#allocation8 + $0x170] sm:$0xff]
    %v750 = vld [vmem:[#allocation8 + $0x178] sm:$0xff]
    %v751 = vld [vmem:[#allocation8 + $0x180] sm:$0xff]
    %v752 = vld [vmem:[#allocation8 + $0x188] sm:$0xff]
    %v753 = vld [vmem:[#allocation8 + $0x190] sm:$0xff]
    %v754 = vld [vmem:[#allocation8 + $0x198] sm:$0xff]
    %v755 = vld [vmem:[#allocation8 + $0x1a0] sm:$0xff]
    %v756 = vld [vmem:[#allocation8 + $0x1a8] sm:$0xff]
    %v757 = vld [vmem:[#allocation8 + $0x1b0] sm:$0xff]
    %v758 = vld [vmem:[#allocation8 + $0x1b8] sm:$0xff]
    %v759 = vld [vmem:[#allocation8 + $0x1c0] sm:$0xff]
    %v760 = vld [vmem:[#allocation8 + $0x1c8] sm:$0xff]
    %v761 = vld [vmem:[#allocation8 + $0x1d0] sm:$0xff]
    %v762 = vld [vmem:[#allocation8 + $0x1d8] sm:$0xff]
    %v763 = vld [vmem:[#allocation8 + $0x1e0] sm:$0xff]
    %v764 = vld [vmem:[#allocation8 + $0x1e8] sm:$0xff]
    %v765 = vld [vmem:[#allocation8 + $0x1f0] sm:$0xff]
    %v766 = vld [vmem:[#allocation8 + $0x1f8] sm:$0xff]
    %v767 = vld [vmem:[#allocation8 + $0x200] sm:$0xff]
    %v768 = vld [vmem:[#allocation8 + $0x208] sm:$0xff]
    %v769 = vld [vmem:[#allocation8 + $0x210] sm:$0xff]
    %v770 = vld [vmem:[#allocation8 + $0x218] sm:$0xff]
    %v771 = vld [vmem:[#allocation8 + $0x220] sm:$0xff]
    %v772 = vld [vmem:[#allocation8 + $0x228] sm:$0xff]
    %v773 = vld [vmem:[#allocation8 + $0x230] sm:$0xff]
    %v774 = vld [vmem:[#allocation8 + $0x238] sm:$0xff]
    %v775 = vld [vmem:[#allocation8 + $0x240] sm:$0xff]
    %v776 = vld [vmem:[#allocation8 + $0x248] sm:$0xff]
    %v777 = vld [vmem:[#allocation8 + $0x250] sm:$0xff]
    %v778 = vld [vmem:[#allocation8 + $0x258] sm:$0xff]
    %v779 = vld [vmem:[#allocation8 + $0x260] sm:$0xff]
    %v780 = vld [vmem:[#allocation8 + $0x268] sm:$0xff]
    %v781 = vld [vmem:[#allocation8 + $0x270] sm:$0xff]
    %v782 = vld [vmem:[#allocation8 + $0x278] sm:$0xff]
    %v783 = vld [vmem:[#allocation8 + $0x280] sm:$0xff]
    %v784 = vld [vmem:[#allocation8 + $0x288] sm:$0xff]
    %v785 = vld [vmem:[#allocation8 + $0x290] sm:$0xff]
    %v786 = vld [vmem:[#allocation8 + $0x298] sm:$0xff]
    %v787 = vld [vmem:[#allocation8 + $0x2a0] sm:$0xff]
    %v788 = vld [vmem:[#allocation8 + $0x2a8] sm:$0xff]
    %v789 = vld [vmem:[#allocation8 + $0x2b0] sm:$0xff]
    %v790 = vld [vmem:[#allocation8 + $0x2b8] sm:$0xff]
    %v791 = vld [vmem:[#allocation8 + $0x2c0] sm:$0xff]
    %v792 = vld [vmem:[#allocation8 + $0x2c8] sm:$0xff]
    %v793 = vld [vmem:[#allocation8 + $0x2d0] sm:$0xff]
    %v794 = vld [vmem:[#allocation8 + $0x2d8] sm:$0xff]
    %v795 = vld [vmem:[#allocation8 + $0x2e0] sm:$0xff]
    %v796 = vld [vmem:[#allocation8 + $0x2e8] sm:$0xff]
    %v797 = vld [vmem:[#allocation8 + $0x2f0] sm:$0xff]
    %v798 = vld [vmem:[#allocation8 + $0x2f8] sm:$0xff]
    %v799 = vld [vmem:[%s8] sm:$0x3]
    %v801 = vlaneseq
    %v802 = vshrl.u32 %v801, 7
    %v803 = vsub.s32 0, %v802
    %v804 = vrot.slane %v799, %v803
    %v805 = vlaneseq
    %v806 = vshrl.u32 %v805, 7
    %v807 = vsub.s32 1, %v806
    %v808 = vrot.slane %v799, %v807
    %v907 = vunpack.c.l.b16 %v703
    %v908 = vunpack.c.h.b16 %v703
    %v909 = vunpack.c.l.b16 %v704
    %v910 = vunpack.c.h.b16 %v704
    %v911 = vunpack.c.l.b16 %v705
    %v912 = vunpack.c.h.b16 %v705
    %v913 = vunpack.c.l.b16 %v706
    %v914 = vunpack.c.h.b16 %v706
    %v915 = vunpack.c.l.b16 %v707
    %v916 = vunpack.c.h.b16 %v707
    %v917 = vunpack.c.l.b16 %v708
    %v918 = vunpack.c.h.b16 %v708
    %v919 = vunpack.c.l.b16 %v709
    %v920 = vunpack.c.h.b16 %v709
    %v921 = vunpack.c.l.b16 %v710
    %v922 = vunpack.c.h.b16 %v710
    %v923 = vunpack.c.l.b16 %v711
    %v924 = vunpack.c.h.b16 %v711
    %v925 = vunpack.c.l.b16 %v712
    %v926 = vunpack.c.h.b16 %v712
    %v927 = vunpack.c.l.b16 %v713
    %v928 = vunpack.c.h.b16 %v713
    %v929 = vunpack.c.l.b16 %v714
    %v930 = vunpack.c.h.b16 %v714
    %v931 = vunpack.c.l.b16 %v715
    %v932 = vunpack.c.h.b16 %v715
    %v933 = vunpack.c.l.b16 %v716
    %v934 = vunpack.c.h.b16 %v716
    %v935 = vunpack.c.l.b16 %v717
    %v936 = vunpack.c.h.b16 %v717
    %v937 = vunpack.c.l.b16 %v718
    %v938 = vunpack.c.h.b16 %v718
    %v939 = vunpack.c.l.b16 %v719
    %v940 = vunpack.c.h.b16 %v719
    %v941 = vunpack.c.l.b16 %v720
    %v942 = vunpack.c.h.b16 %v720
    %v943 = vunpack.c.l.b16 %v721
    %v944 = vunpack.c.h.b16 %v721
    %v945 = vunpack.c.l.b16 %v722
    %v946 = vunpack.c.h.b16 %v722
    %v947 = vunpack.c.l.b16 %v723
    %v948 = vunpack.c.h.b16 %v723
    %v949 = vunpack.c.l.b16 %v724
    %v950 = vunpack.c.h.b16 %v724
    %v951 = vunpack.c.l.b16 %v725
    %v952 = vunpack.c.h.b16 %v725
    %v953 = vunpack.c.l.b16 %v726
    %v954 = vunpack.c.h.b16 %v726
    %v955 = vunpack.c.l.b16 %v727
    %v956 = vunpack.c.h.b16 %v727
    %v957 = vunpack.c.l.b16 %v728
    %v958 = vunpack.c.h.b16 %v728
    %v959 = vunpack.c.l.b16 %v729
    %v960 = vunpack.c.h.b16 %v729
    %v961 = vunpack.c.l.b16 %v730
    %v962 = vunpack.c.h.b16 %v730
    %v963 = vunpack.c.l.b16 %v731
    %v964 = vunpack.c.h.b16 %v731
    %v965 = vunpack.c.l.b16 %v732
    %v966 = vunpack.c.h.b16 %v732
    %v967 = vunpack.c.l.b16 %v733
    %v968 = vunpack.c.h.b16 %v733
    %v969 = vunpack.c.l.b16 %v734
    %v970 = vunpack.c.h.b16 %v734
    %v971 = vunpack.c.l.b16 %v735
    %v972 = vunpack.c.h.b16 %v735
    %v973 = vunpack.c.l.b16 %v736
    %v974 = vunpack.c.h.b16 %v736
    %v975 = vunpack.c.l.b16 %v737
    %v976 = vunpack.c.h.b16 %v737
    %v977 = vunpack.c.l.b16 %v738
    %v978 = vunpack.c.h.b16 %v738
    %v979 = vunpack.c.l.b16 %v739
    %v980 = vunpack.c.h.b16 %v739
    %v981 = vunpack.c.l.b16 %v740
    %v982 = vunpack.c.h.b16 %v740
    %v983 = vunpack.c.l.b16 %v741
    %v984 = vunpack.c.h.b16 %v741
    %v985 = vunpack.c.l.b16 %v742
    %v986 = vunpack.c.h.b16 %v742
    %v987 = vunpack.c.l.b16 %v743
    %v988 = vunpack.c.h.b16 %v743
    %v989 = vunpack.c.l.b16 %v744
    %v990 = vunpack.c.h.b16 %v744
    %v991 = vunpack.c.l.b16 %v745
    %v992 = vunpack.c.h.b16 %v745
    %v993 = vunpack.c.l.b16 %v746
    %v994 = vunpack.c.h.b16 %v746
    %v995 = vunpack.c.l.b16 %v747
    %v996 = vunpack.c.h.b16 %v747
    %v997 = vunpack.c.l.b16 %v748
    %v998 = vunpack.c.h.b16 %v748
    %v999 = vunpack.c.l.b16 %v749
    %v1000 = vunpack.c.h.b16 %v749
    %v1001 = vunpack.c.l.b16 %v750
    %v1002 = vunpack.c.h.b16 %v750
    %v1003 = vunpack.c.l.b16 %v751
    %v1004 = vunpack.c.h.b16 %v751
    %v1005 = vunpack.c.l.b16 %v752
    %v1006 = vunpack.c.h.b16 %v752
    %v1007 = vunpack.c.l.b16 %v753
    %v1008 = vunpack.c.h.b16 %v753
    %v1009 = vunpack.c.l.b16 %v754
    %v1010 = vunpack.c.h.b16 %v754
    %v1011 = vunpack.c.l.b16 %v755
    %v1012 = vunpack.c.h.b16 %v755
    %v1013 = vunpack.c.l.b16 %v756
    %v1014 = vunpack.c.h.b16 %v756
    %v1015 = vunpack.c.l.b16 %v757
    %v1016 = vunpack.c.h.b16 %v757
    %v1017 = vunpack.c.l.b16 %v758
    %v1018 = vunpack.c.h.b16 %v758
    %v1019 = vunpack.c.l.b16 %v759
    %v1020 = vunpack.c.h.b16 %v759
    %v1021 = vunpack.c.l.b16 %v760
    %v1022 = vunpack.c.h.b16 %v760
    %v1023 = vunpack.c.l.b16 %v761
    %v1024 = vunpack.c.h.b16 %v761
    %v1025 = vunpack.c.l.b16 %v762
    %v1026 = vunpack.c.h.b16 %v762
    %v1027 = vunpack.c.l.b16 %v763
    %v1028 = vunpack.c.h.b16 %v763
    %v1029 = vunpack.c.l.b16 %v764
    %v1030 = vunpack.c.h.b16 %v764
    %v1031 = vunpack.c.l.b16 %v765
    %v1032 = vunpack.c.h.b16 %v765
    %v1033 = vunpack.c.l.b16 %v766
    %v1034 = vunpack.c.h.b16 %v766
    %v1035 = vunpack.c.l.b16 %v767
    %v1036 = vunpack.c.h.b16 %v767
    %v1037 = vunpack.c.l.b16 %v768
    %v1038 = vunpack.c.h.b16 %v768
    %v1039 = vunpack.c.l.b16 %v769
    %v1040 = vunpack.c.h.b16 %v769
    %v1041 = vunpack.c.l.b16 %v770
    %v1042 = vunpack.c.h.b16 %v770
    %v1043 = vunpack.c.l.b16 %v771
    %v1044 = vunpack.c.h.b16 %v771
    %v1045 = vunpack.c.l.b16 %v772
    %v1046 = vunpack.c.h.b16 %v772
    %v1047 = vunpack.c.l.b16 %v773
    %v1048 = vunpack.c.h.b16 %v773
    %v1049 = vunpack.c.l.b16 %v774
    %v1050 = vunpack.c.h.b16 %v774
    %v1051 = vunpack.c.l.b16 %v775
    %v1052 = vunpack.c.h.b16 %v775
    %v1053 = vunpack.c.l.b16 %v776
    %v1054 = vunpack.c.h.b16 %v776
    %v1055 = vunpack.c.l.b16 %v777
    %v1056 = vunpack.c.h.b16 %v777
    %v1057 = vunpack.c.l.b16 %v778
    %v1058 = vunpack.c.h.b16 %v778
    %v1059 = vunpack.c.l.b16 %v779
    %v1060 = vunpack.c.h.b16 %v779
    %v1061 = vunpack.c.l.b16 %v780
    %v1062 = vunpack.c.h.b16 %v780
    %v1063 = vunpack.c.l.b16 %v781
    %v1064 = vunpack.c.h.b16 %v781
    %v1065 = vunpack.c.l.b16 %v782
    %v1066 = vunpack.c.h.b16 %v782
    %v1067 = vunpack.c.l.b16 %v783
    %v1068 = vunpack.c.h.b16 %v783
    %v1069 = vunpack.c.l.b16 %v784
    %v1070 = vunpack.c.h.b16 %v784
    %v1071 = vunpack.c.l.b16 %v785
    %v1072 = vunpack.c.h.b16 %v785
    %v1073 = vunpack.c.l.b16 %v786
    %v1074 = vunpack.c.h.b16 %v786
    %v1075 = vunpack.c.l.b16 %v787
    %v1076 = vunpack.c.h.b16 %v787
    %v1077 = vunpack.c.l.b16 %v788
    %v1078 = vunpack.c.h.b16 %v788
    %v1079 = vunpack.c.l.b16 %v789
    %v1080 = vunpack.c.h.b16 %v789
    %v1081 = vunpack.c.l.b16 %v790
    %v1082 = vunpack.c.h.b16 %v790
    %v1083 = vunpack.c.l.b16 %v791
    %v1084 = vunpack.c.h.b16 %v791
    %v1085 = vunpack.c.l.b16 %v792
    %v1086 = vunpack.c.h.b16 %v792
    %v1087 = vunpack.c.l.b16 %v793
    %v1088 = vunpack.c.h.b16 %v793
    %v1089 = vunpack.c.l.b16 %v794
    %v1090 = vunpack.c.h.b16 %v794
    %v1091 = vunpack.c.l.b16 %v795
    %v1092 = vunpack.c.h.b16 %v795
    %v1093 = vunpack.c.l.b16 %v796
    %v1094 = vunpack.c.h.b16 %v796
    %v1095 = vunpack.c.l.b16 %v797
    %v1096 = vunpack.c.h.b16 %v797
    %v1097 = vunpack.c.l.b16 %v798
    %v1098 = vunpack.c.h.b16 %v798
    %v1099 = vpack.c.b16 %v909, %v907
    %v1100 = vpack.c.b16 %v910, %v908
    %v1101 = vpack.c.b16 %v913, %v911
    %v1102 = vpack.c.b16 %v914, %v912
    %v1103 = vpack.c.b16 %v917, %v915
    %v1104 = vpack.c.b16 %v918, %v916
    %v1105 = vpack.c.b16 %v921, %v919
    %v1106 = vpack.c.b16 %v922, %v920
    %v1107 = vpack.c.b16 %v925, %v923
    %v1108 = vpack.c.b16 %v926, %v924
    %v1109 = vpack.c.b16 %v929, %v927
    %v1110 = vpack.c.b16 %v930, %v928
    %v1111 = vpack.c.b16 %v933, %v931
    %v1112 = vpack.c.b16 %v934, %v932
    %v1113 = vpack.c.b16 %v937, %v935
    %v1114 = vpack.c.b16 %v938, %v936
    %v1115 = vpack.c.b16 %v941, %v939
    %v1116 = vpack.c.b16 %v942, %v940
    %v1117 = vpack.c.b16 %v945, %v943
    %v1118 = vpack.c.b16 %v946, %v944
    %v1119 = vpack.c.b16 %v949, %v947
    %v1120 = vpack.c.b16 %v950, %v948
    %v1121 = vpack.c.b16 %v953, %v951
    %v1122 = vpack.c.b16 %v954, %v952
    %v1123 = vpack.c.b16 %v957, %v955
    %v1124 = vpack.c.b16 %v958, %v956
    %v1125 = vpack.c.b16 %v961, %v959
    %v1126 = vpack.c.b16 %v962, %v960
    %v1127 = vpack.c.b16 %v965, %v963
    %v1128 = vpack.c.b16 %v966, %v964
    %v1129 = vpack.c.b16 %v969, %v967
    %v1130 = vpack.c.b16 %v970, %v968
    %v1131 = vpack.c.b16 %v973, %v971
    %v1132 = vpack.c.b16 %v974, %v972
    %v1133 = vpack.c.b16 %v977, %v975
    %v1134 = vpack.c.b16 %v978, %v976
    %v1135 = vpack.c.b16 %v981, %v979
    %v1136 = vpack.c.b16 %v982, %v980
    %v1137 = vpack.c.b16 %v985, %v983
    %v1138 = vpack.c.b16 %v986, %v984
    %v1139 = vpack.c.b16 %v989, %v987
    %v1140 = vpack.c.b16 %v990, %v988
    %v1141 = vpack.c.b16 %v993, %v991
    %v1142 = vpack.c.b16 %v994, %v992
    %v1143 = vpack.c.b16 %v997, %v995
    %v1144 = vpack.c.b16 %v998, %v996
    %v1145 = vpack.c.b16 %v1001, %v999
    %v1146 = vpack.c.b16 %v1002, %v1000
    %v1147 = vpack.c.b16 %v1005, %v1003
    %v1148 = vpack.c.b16 %v1006, %v1004
    %v1149 = vpack.c.b16 %v1009, %v1007
    %v1150 = vpack.c.b16 %v1010, %v1008
    %v1151 = vpack.c.b16 %v1013, %v1011
    %v1152 = vpack.c.b16 %v1014, %v1012
    %v1153 = vpack.c.b16 %v1017, %v1015
    %v1154 = vpack.c.b16 %v1018, %v1016
    %v1155 = vpack.c.b16 %v1021, %v1019
    %v1156 = vpack.c.b16 %v1022, %v1020
    %v1157 = vpack.c.b16 %v1025, %v1023
    %v1158 = vpack.c.b16 %v1026, %v1024
    %v1159 = vpack.c.b16 %v1029, %v1027
    %v1160 = vpack.c.b16 %v1030, %v1028
    %v1161 = vpack.c.b16 %v1033, %v1031
    %v1162 = vpack.c.b16 %v1034, %v1032
    %v1163 = vpack.c.b16 %v1037, %v1035
    %v1164 = vpack.c.b16 %v1038, %v1036
    %v1165 = vpack.c.b16 %v1041, %v1039
    %v1166 = vpack.c.b16 %v1042, %v1040
    %v1167 = vpack.c.b16 %v1045, %v1043
    %v1168 = vpack.c.b16 %v1046, %v1044
    %v1169 = vpack.c.b16 %v1049, %v1047
    %v1170 = vpack.c.b16 %v1050, %v1048
    %v1171 = vpack.c.b16 %v1053, %v1051
    %v1172 = vpack.c.b16 %v1054, %v1052
    %v1173 = vpack.c.b16 %v1057, %v1055
    %v1174 = vpack.c.b16 %v1058, %v1056
    %v1175 = vpack.c.b16 %v1061, %v1059
    %v1176 = vpack.c.b16 %v1062, %v1060
    %v1177 = vpack.c.b16 %v1065, %v1063
    %v1178 = vpack.c.b16 %v1066, %v1064
    %v1179 = vpack.c.b16 %v1069, %v1067
    %v1180 = vpack.c.b16 %v1070, %v1068
    %v1181 = vpack.c.b16 %v1073, %v1071
    %v1182 = vpack.c.b16 %v1074, %v1072
    %v1183 = vpack.c.b16 %v1077, %v1075
    %v1184 = vpack.c.b16 %v1078, %v1076
    %v1185 = vpack.c.b16 %v1081, %v1079
    %v1186 = vpack.c.b16 %v1082, %v1080
    %v1187 = vpack.c.b16 %v1085, %v1083
    %v1188 = vpack.c.b16 %v1086, %v1084
    %v1189 = vpack.c.b16 %v1089, %v1087
    %v1190 = vpack.c.b16 %v1090, %v1088
    %v1191 = vpack.c.b16 %v1093, %v1091
    %v1192 = vpack.c.b16 %v1094, %v1092
    %v1193 = vpack.c.b16 %v1097, %v1095
    %v1194 = vpack.c.b16 %v1098, %v1096
    %1291 = vmatprep.subr.bf16.mxu0 %v1100
    %1292 = vmatpush1.bf16.msra.mxu0 %v1099
    %1293 = vmatprep.subr.bf16.mxu0 %v1102
    %1294 = vmatpush1.bf16.msra.mxu0 %v1101
    %1295 = vmatprep.subr.bf16.mxu0 %v1104
    %1296 = vmatpush1.bf16.msra.mxu0 %v1103
    %1297 = vmatprep.subr.bf16.mxu0 %v1106
    %1298 = vmatpush1.bf16.msra.mxu0 %v1105
    %1299 = vmatprep.subr.bf16.mxu0 %v1108
    %1300 = vmatpush1.bf16.msra.mxu0 %v1107
    %1301 = vmatprep.subr.bf16.mxu0 %v1110
    %1302 = vmatpush1.bf16.msra.mxu0 %v1109
    %1303 = vmatprep.subr.bf16.mxu0 %v1112
    %1304 = vmatpush1.bf16.msra.mxu0 %v1111
    %1305 = vmatprep.subr.bf16.mxu0 %v1114
    %1306 = vmatpush1.bf16.msra.mxu0 %v1113
    %1307 = vmatprep.subr.bf16.mxu0 %v1116
    %1308 = vmatpush1.bf16.msra.mxu0 %v1115
    %1309 = vmatprep.subr.bf16.mxu0 %v1118
    %1310 = vmatpush1.bf16.msra.mxu0 %v1117
    %1311 = vmatprep.subr.bf16.mxu0 %v1120
    %1312 = vmatpush1.bf16.msra.mxu0 %v1119
    %1313 = vmatprep.subr.bf16.mxu0 %v1122
    %1314 = vmatpush1.bf16.msra.mxu0 %v1121
    %1315 = vmatprep.subr.bf16.mxu0 %v1124
    %1316 = vmatpush1.bf16.msra.mxu0 %v1123
    %1317 = vmatprep.subr.bf16.mxu0 %v1126
    %1318 = vmatpush1.bf16.msra.mxu0 %v1125
    %1319 = vmatprep.subr.bf16.mxu0 %v1128
    %1320 = vmatpush1.bf16.msra.mxu0 %v1127
    %1321 = vmatprep.subr.bf16.mxu0 %v1130
    %1322 = vmatpush1.bf16.msra.mxu0 %v1129
    %1323 = vmatprep.mubr.bf16.mxu0 %v698
    %1324 = vmatmul.mubr.bf16.gmra.mrb[0].mxu0 %v697
    %v1325 = vpop.f32.mrb[0].mxu0
    %v1326 = vadd.f32 %v804, %v1325
    %v1327 = vpop.f32.mrb[0].mxu0
    %v1328 = vadd.f32 %v808, %v1327
    %v1329 = vpop.f32.mrb[0].mxu0
    %v1330 = vpop.f32.mrb[0].mxu0
    %1331 = vdwg.mxu0
    %1332 = vmatprep.subr.bf16.mxu0 %v1132
    %1333 = vmatpush1.bf16.msra.mxu0 %v1131
    %1334 = vmatprep.subr.bf16.mxu0 %v1134
    %1335 = vmatpush1.bf16.msra.mxu0 %v1133
    %1336 = vmatprep.subr.bf16.mxu0 %v1136
    %1337 = vmatpush1.bf16.msra.mxu0 %v1135
    %1338 = vmatprep.subr.bf16.mxu0 %v1138
    %1339 = vmatpush1.bf16.msra.mxu0 %v1137
    %1340 = vmatprep.subr.bf16.mxu0 %v1140
    %1341 = vmatpush1.bf16.msra.mxu0 %v1139
    %1342 = vmatprep.subr.bf16.mxu0 %v1142
    %1343 = vmatpush1.bf16.msra.mxu0 %v1141
    %1344 = vmatprep.subr.bf16.mxu0 %v1144
    %1345 = vmatpush1.bf16.msra.mxu0 %v1143
    %1346 = vmatprep.subr.bf16.mxu0 %v1146
    %1347 = vmatpush1.bf16.msra.mxu0 %v1145
    %1348 = vmatprep.subr.bf16.mxu0 %v1148
    %1349 = vmatpush1.bf16.msra.mxu0 %v1147
    %1350 = vmatprep.subr.bf16.mxu0 %v1150
    %1351 = vmatpush1.bf16.msra.mxu0 %v1149
    %1352 = vmatprep.subr.bf16.mxu0 %v1152
    %1353 = vmatpush1.bf16.msra.mxu0 %v1151
    %1354 = vmatprep.subr.bf16.mxu0 %v1154
    %1355 = vmatpush1.bf16.msra.mxu0 %v1153
    %1356 = vmatprep.subr.bf16.mxu0 %v1156
    %1357 = vmatpush1.bf16.msra.mxu0 %v1155
    %1358 = vmatprep.subr.bf16.mxu0 %v1158
    %1359 = vmatpush1.bf16.msra.mxu0 %v1157
    %1360 = vmatprep.subr.bf16.mxu0 %v1160
    %1361 = vmatpush1.bf16.msra.mxu0 %v1159
    %1362 = vmatprep.subr.bf16.mxu0 %v1162
    %1363 = vmatpush1.bf16.msra.mxu0 %v1161
    %1364 = vmatprep.mubr.bf16.mxu0 %v700
    %1365 = vmatmul.mubr.bf16.gmra.mrb[0].mxu0 %v699
    %v1366 = vpop.f32.mrb[0].mxu0
    %v1367 = vadd.f32 %v1326, %v1366
    %v1368 = vpop.f32.mrb[0].mxu0
    %v1369 = vadd.f32 %v1328, %v1368
    %v1370 = vpop.f32.mrb[0].mxu0
    %v1371 = vpop.f32.mrb[0].mxu0
    %1372 = vdwg.mxu0
    %1373 = vmatprep.subr.bf16.mxu0 %v1164
    %1374 = vmatpush1.bf16.msra.mxu0 %v1163
    %1375 = vmatprep.subr.bf16.mxu0 %v1166
    %1376 = vmatpush1.bf16.msra.mxu0 %v1165
    %1377 = vmatprep.subr.bf16.mxu0 %v1168
    %1378 = vmatpush1.bf16.msra.mxu0 %v1167
    %1379 = vmatprep.subr.bf16.mxu0 %v1170
    %1380 = vmatpush1.bf16.msra.mxu0 %v1169
    %1381 = vmatprep.subr.bf16.mxu0 %v1172
    %1382 = vmatpush1.bf16.msra.mxu0 %v1171
    %1383 = vmatprep.subr.bf16.mxu0 %v1174
    %1384 = vmatpush1.bf16.msra.mxu0 %v1173
    %1385 = vmatprep.subr.bf16.mxu0 %v1176
    %1386 = vmatpush1.bf16.msra.mxu0 %v1175
    %1387 = vmatprep.subr.bf16.mxu0 %v1178
    %1388 = vmatpush1.bf16.msra.mxu0 %v1177
    %1389 = vmatprep.subr.bf16.mxu0 %v1180
    %1390 = vmatpush1.bf16.msra.mxu0 %v1179
    %1391 = vmatprep.subr.bf16.mxu0 %v1182
    %1392 = vmatpush1.bf16.msra.mxu0 %v1181
    %1393 = vmatprep.subr.bf16.mxu0 %v1184
    %1394 = vmatpush1.bf16.msra.mxu0 %v1183
    %1395 = vmatprep.subr.bf16.mxu0 %v1186
    %1396 = vmatpush1.bf16.msra.mxu0 %v1185
    %1397 = vmatprep.subr.bf16.mxu0 %v1188
    %1398 = vmatpush1.bf16.msra.mxu0 %v1187
    %1399 = vmatprep.subr.bf16.mxu0 %v1190
    %1400 = vmatpush1.bf16.msra.mxu0 %v1189
    %1401 = vmatprep.subr.bf16.mxu0 %v1192
    %1402 = vmatpush1.bf16.msra.mxu0 %v1191
    %1403 = vmatprep.subr.bf16.mxu0 %v1194
    %1404 = vmatpush1.bf16.msra.mxu0 %v1193
    %1405 = vmatprep.mubr.bf16.mxu0 %v702
    %1406 = vmatmul.mubr.bf16.gmra.mrb[0].mxu0 %v701
    %v1407 = vpop.f32.mrb[0].mxu0
    %v1408 = vadd.f32 %v1367, %v1407
    %v1409 = vpop.f32.mrb[0].mxu0
    %v1410 = vadd.f32 %v1369, %v1409
    %v1411 = vpop.f32.mrb[0].mxu0
    %v1412 = vpop.f32.mrb[0].mxu0
    %1413 = vdwg.mxu0
    %v1414 = vmax.f32 %v1408, 0.0
    %v1415 = vmax.f32 %v1410, 0.0
    %v1416 = vpack.c.bf16 %v1414, %v1414
    %v1417 = vpack.c.bf16 %v1415, %v1415
    %v1418 = vld [vmem:[%s9] sm:$0xf]
    %v1419 = vld [vmem:[%s9 + $0x4] sm:$0xf]
    %v1420 = vld [vmem:[%s9 + $0x8] sm:$0xf]
    %v1421 = vld [vmem:[%s9 + $0xc] sm:$0xf]
    %v1422 = vld [vmem:[%s9 + $0x10] sm:$0xf]
    %v1423 = vld [vmem:[%s9 + $0x14] sm:$0xf]
    %v1424 = vld [vmem:[%s9 + $0x18] sm:$0xf]
    %v1425 = vld [vmem:[%s9 + $0x1c] sm:$0xf]
    %v1426 = vld [vmem:[%s9 + $0x20] sm:$0xf]
    %v1427 = vld [vmem:[%s9 + $0x24] sm:$0xf]
    %v1428 = vld [vmem:[%s9 + $0x28] sm:$0xf]
    %v1429 = vld [vmem:[%s9 + $0x2c] sm:$0xf]
    %v1430 = vld [vmem:[%s9 + $0x30] sm:$0xf]
    %v1431 = vld [vmem:[%s9 + $0x34] sm:$0xf]
    %v1432 = vld [vmem:[%s9 + $0x38] sm:$0xf]
    %v1433 = vld [vmem:[%s9 + $0x3c] sm:$0xf]
    %v1434 = vld [vmem:[%s9 + $0x40] sm:$0xf]
    %v1435 = vld [vmem:[%s9 + $0x44] sm:$0xf]
    %v1436 = vld [vmem:[%s9 + $0x48] sm:$0xf]
    %v1437 = vld [vmem:[%s9 + $0x4c] sm:$0xf]
    %v1438 = vld [vmem:[%s9 + $0x50] sm:$0xf]
    %v1439 = vld [vmem:[%s9 + $0x54] sm:$0xf]
    %v1440 = vld [vmem:[%s9 + $0x58] sm:$0xf]
    %v1441 = vld [vmem:[%s9 + $0x5c] sm:$0xf]
    %v1442 = vld [vmem:[%s9 + $0x60] sm:$0xf]
    %v1443 = vld [vmem:[%s9 + $0x64] sm:$0xf]
    %v1444 = vld [vmem:[%s9 + $0x68] sm:$0xf]
    %v1445 = vld [vmem:[%s9 + $0x6c] sm:$0xf]
    %v1446 = vld [vmem:[%s9 + $0x70] sm:$0xf]
    %v1447 = vld [vmem:[%s9 + $0x74] sm:$0xf]
    %v1448 = vld [vmem:[%s9 + $0x78] sm:$0xf]
    %v1449 = vld [vmem:[%s9 + $0x7c] sm:$0xf]
    %v1450 = vld [vmem:[%s10] sm:$0x1]
    %v1452 = vlaneseq
    %v1453 = vshrl.u32 %v1452, 7
    %v1454 = vsub.s32 0, %v1453
    %v1455 = vrot.slane %v1450, %v1454
    %v1489 = vunpack.c.l.b16 %v1418
    %v1490 = vunpack.c.l.b16 %v1419
    %v1491 = vunpack.c.l.b16 %v1420
    %v1492 = vunpack.c.l.b16 %v1421
    %v1493 = vunpack.c.l.b16 %v1422
    %v1494 = vunpack.c.l.b16 %v1423
    %v1495 = vunpack.c.l.b16 %v1424
    %v1496 = vunpack.c.l.b16 %v1425
    %v1497 = vunpack.c.l.b16 %v1426
    %v1498 = vunpack.c.l.b16 %v1427
    %v1499 = vunpack.c.l.b16 %v1428
    %v1500 = vunpack.c.l.b16 %v1429
    %v1501 = vunpack.c.l.b16 %v1430
    %v1502 = vunpack.c.l.b16 %v1431
    %v1503 = vunpack.c.l.b16 %v1432
    %v1504 = vunpack.c.l.b16 %v1433
    %v1505 = vunpack.c.l.b16 %v1434
    %v1506 = vunpack.c.l.b16 %v1435
    %v1507 = vunpack.c.l.b16 %v1436
    %v1508 = vunpack.c.l.b16 %v1437
    %v1509 = vunpack.c.l.b16 %v1438
    %v1510 = vunpack.c.l.b16 %v1439
    %v1511 = vunpack.c.l.b16 %v1440
    %v1512 = vunpack.c.l.b16 %v1441
    %v1513 = vunpack.c.l.b16 %v1442
    %v1514 = vunpack.c.l.b16 %v1443
    %v1515 = vunpack.c.l.b16 %v1444
    %v1516 = vunpack.c.l.b16 %v1445
    %v1517 = vunpack.c.l.b16 %v1446
    %v1518 = vunpack.c.l.b16 %v1447
    %v1519 = vunpack.c.l.b16 %v1448
    %v1520 = vunpack.c.l.b16 %v1449
    %v1521 = vpack.c.b16 %v1490, %v1489
    %v1522 = vpack.c.b16 %v1492, %v1491
    %v1523 = vpack.c.b16 %v1494, %v1493
    %v1524 = vpack.c.b16 %v1496, %v1495
    %v1525 = vpack.c.b16 %v1498, %v1497
    %v1526 = vpack.c.b16 %v1500, %v1499
    %v1527 = vpack.c.b16 %v1502, %v1501
    %v1528 = vpack.c.b16 %v1504, %v1503
    %v1529 = vpack.c.b16 %v1506, %v1505
    %v1530 = vpack.c.b16 %v1508, %v1507
    %v1531 = vpack.c.b16 %v1510, %v1509
    %v1532 = vpack.c.b16 %v1512, %v1511
    %v1533 = vpack.c.b16 %v1514, %v1513
    %v1534 = vpack.c.b16 %v1516, %v1515
    %v1535 = vpack.c.b16 %v1518, %v1517
    %v1536 = vpack.c.b16 %v1520, %v1519
    %1553 = vmatprep.subr.bf16.mxu0 0
    %1554 = vmatpush1.bf16.msra.mxu0 %v1521
    %1555 = vmatprep.subr.bf16.mxu0 0
    %1556 = vmatpush1.bf16.msra.mxu0 %v1522
    %1557 = vmatprep.subr.bf16.mxu0 0
    %1558 = vmatpush1.bf16.msra.mxu0 %v1523
    %1559 = vmatprep.subr.bf16.mxu0 0
    %1560 = vmatpush1.bf16.msra.mxu0 %v1524
    %1561 = vmatprep.subr.bf16.mxu0 0
    %1562 = vmatpush1.bf16.msra.mxu0 %v1525
    %1563 = vmatprep.subr.bf16.mxu0 0
    %1564 = vmatpush1.bf16.msra.mxu0 %v1526
    %1565 = vmatprep.subr.bf16.mxu0 0
    %1566 = vmatpush1.bf16.msra.mxu0 %v1527
    %1567 = vmatprep.subr.bf16.mxu0 0
    %1568 = vmatpush1.bf16.msra.mxu0 %v1528
    %1569 = vmatprep.subr.bf16.mxu0 0
    %1570 = vmatpush1.bf16.msra.mxu0 %v1529
    %1571 = vmatprep.subr.bf16.mxu0 0
    %1572 = vmatpush1.bf16.msra.mxu0 %v1530
    %1573 = vmatprep.subr.bf16.mxu0 0
    %1574 = vmatpush1.bf16.msra.mxu0 %v1531
    %1575 = vmatprep.subr.bf16.mxu0 0
    %1576 = vmatpush1.bf16.msra.mxu0 %v1532
    %1577 = vmatprep.subr.bf16.mxu0 0
    %1578 = vmatpush1.bf16.msra.mxu0 %v1533
    %1579 = vmatprep.subr.bf16.mxu0 0
    %1580 = vmatpush1.bf16.msra.mxu0 %v1534
    %1581 = vmatprep.subr.bf16.mxu0 0
    %1582 = vmatpush1.bf16.msra.mxu0 %v1535
    %1583 = vmatprep.subr.bf16.mxu0 0
    %1584 = vmatpush1.bf16.msra.mxu0 %v1536
    %1585 = vmatprep.mubr.bf16.mxu0 %v1417
    %1586 = vmatmul.mubr.bf16.gmra.mrb[0].mxu0 %v1416
    %v1587 = vpop.f32.mrb[0].mxu0
    %v1588 = vadd.f32 %v1455, %v1587
    %v1589 = vpop.f32.mrb[0].mxu0
    %v1590 = vpop.f32.mrb[0].mxu0
    %v1591 = vpop.f32.mrb[0].mxu0
    %1592 = vdwg.mxu0
    %vm1593 = vcmask 58368
    %1594 = vst.msk [vmem:[#allocation10] sm:$0x3] %vm1593, %v1588
    // Predicated region
    $region58: #{cnn_forward.1} parent=1 // pred_check
      _
    $region59: #{cnn_forward.1} parent=1 // pred_check_branch
      %1596 = sbr.rel (0) target = $region61
    $region60: #{cnn_forward.1} parent=1 // pred_region
      %s1598 = ssub.s32 32, 32
      %1599 = vsyncadd [#allocation7], %s1598
      %s1601 = sshll.u32 [#allocation10], 4
      %s1602 = int_to_ptr.vmem [resolvable:$true] %s1601
      %1604 = dma.vmem_to_hbm [thread:$0]  %s1602, 32, %s12, [#allocation7]
    $region61: #{cnn_forward.1} parent=1 // pred_fallthru
      _
    // Predicated region
    $region62: #{cnn_forward.1} parent=1 // pred_check
      _
    $region63: #{cnn_forward.1} parent=1 // pred_check_branch
      %1606 = sbr.rel (0) target = $region65
    $region64: #{cnn_forward.1} parent=1 // pred_region
      %1607 = dma.done [#allocation7], 32
    $region65: #{cnn_forward.1} parent=1 // pred_fallthru
      _
    %1608 = vsyncpa [#allocation6], 1
    %1609 = vsyncpa [#allocation9], 1
    %1610 = vsyncpa [#allocation7], 1

</llo_original>
